<compile_context>
chip_gen: v5e
topology: v5e:2x2
jax: 0.10.0
libtpu: 0.0.40
codegen_flags: <defaults>
</compile_context>

<pallas_src>
import functools

import jax
import jax.numpy as jnp
from jax.experimental import pallas as pl
from jax.experimental.pallas import tpu as pltpu


_LANE = 128
_SUBLANE = 8
_MAX_TB = 128                     # MXU row width (256 also viable on v6e/v7x)
_GX_CHUNK_BYTES = 4 * 1024 * 1024  # per-chunk gx slab budget (f32, per tile)


def _round_up(x, m):
    return (x + m - 1) // m * m


def gru_fc_kernel(x_ref, w_ih_ref, w_hh_ref, b_gx_ref, b_hn_ref,
                  w1_ref, b1_ref, w2_ref, b2_ref, out_ref,
                  *, seq_len, batch_tile, hidden_pad, n_chains, time_chunk):
    T, TB, Hp = seq_len, batch_tile, hidden_pad
    CB = TB // n_chains

    w_ih = w_ih_ref[...]          # (I, 3Hp)   matmul dtype, gate order r,z,n
    w_hh = w_hh_ref[...]          # (Hp, 3Hp)  recurrent dtype
    b_gx = b_gx_ref[...]          # (1, 3Hp)   f32, b_ih(all)+b_hh(r,z) folded
    b_hn = b_hn_ref[...]          # (CB, Hp)   f32, pre-broadcast n-gate h-bias
    mm_dtype = w_ih.dtype

    def rec_matmul(h_c):
        # Recurrent matmul defaults to f32 operands: no per-step cast of h on
        # the serial chain and no bf16 rounding accumulation over timesteps.
        lhs = h_c if w_hh.dtype == jnp.float32 else h_c.astype(w_hh.dtype)
        return jnp.dot(lhs, w_hh, preferred_element_type=jnp.float32)

    # n_chains independent batch sub-chains (rows [c*CB, (c+1)*CB) of the
    # tile); interleaving their per-step work lets the MXU matmul of one chain
    # overlap the EUP/VPU gate math of the other on the latency-bound path.
    hs = [jnp.zeros((CB, Hp), jnp.float32) for _ in range(n_chains)]

    # Hoisted input projection, computed in time chunks: one (tc*TB, I) @
    # (I, 3Hp) MXU matmul per chunk keeps the gx slab bounded in VMEM.
    for t0 in range(0, T, time_chunk):
        tc = min(time_chunk, T - t0)
        gx_chunk = jnp.dot(x_ref[t0 * TB:(t0 + tc) * TB, :], w_ih,
                           preferred_element_type=jnp.float32) + b_gx

        for s in range(tc):
            base = s * TB
            new_hs = []
            for c in range(n_chains):
                gx = gx_chunk[base + c * CB:base + (c + 1) * CB, :]
                gh = rec_matmul(hs[c])
                # 128-lane-aligned gate slices: plain vreg reads.
                r = jax.nn.sigmoid(gx[:, 0:Hp] + gh[:, 0:Hp])
                z = jax.nn.sigmoid(gx[:, Hp:2 * Hp] + gh[:, Hp:2 * Hp])
                n = jnp.tanh(gx[:, 2 * Hp:] + r * (gh[:, 2 * Hp:] + b_hn))
                new_hs.append((1.0 - z) * n + z * hs[c])
            hs = new_hs

    h_last = hs[0] if n_chains == 1 else jnp.concatenate(hs, axis=0)  # (TB,Hp)

    # fc head: Linear(H,H) -> ReLU -> Linear(H,1) on the last hidden state.
    fc1 = jnp.dot(h_last.astype(mm_dtype), w1_ref[...],
                  preferred_element_type=jnp.float32) + b1_ref[...]
    fc1 = jnp.maximum(fc1, 0.0)
    # (H,1) matmul replaced by an elementwise mul + lane reduction.
    logits = jnp.sum(fc1 * w2_ref[...], axis=-1)            # (TB,)
    row = logits.reshape(1, TB) + b2_ref[...]                # lane-dense row
    out_ref[...] = jnp.broadcast_to(row, (8, TB)).astype(out_ref.dtype)


def independent_gru_forward(x, params, matmul_dtype=jnp.bfloat16,
                            recurrent_dtype=jnp.float32):
    """x: (B, T, I) batch_first float32; params in PyTorch layout. Returns (B, 1)."""
    B, T, I = x.shape
    H = params["w_hh"].shape[1]
    f32 = jnp.float32

    Hp = _round_up(H, _LANE)
    Bp8 = _round_up(B, _SUBLANE)

    # Batch tile: as large as the batch allows (up to the MXU row width), but
    # keep >= 2 tiles when possible so v7x megacore gets both TensorCores.
    if Bp8 >= 2 * _MAX_TB:
        TB = _MAX_TB
    elif Bp8 >= 32:
        TB = min(_MAX_TB, _round_up((Bp8 + 1) // 2, 16))
    else:
        TB = Bp8
    Bp = _round_up(Bp8, TB)
    n_tiles = Bp // TB

    # Two interleaved sub-chains when the tile splits into 8-aligned halves.
    n_chains = 2 if (TB >= 16 and TB % 16 == 0) else 1
    CB = TB // n_chains

    time_chunk = max(1, min(T, _GX_CHUNK_BYTES // (TB * 3 * Hp * 4)))

    # --- weights: transpose to (in, out) for row-major x @ W on the MXU, and
    #     pad each gate to its own 128-lane-aligned block of width Hp.
    def gate_pad_t(w, in_pad):                # w: (3H, in) torch layout r,z,n
        w_t = w.T.astype(f32)                 # (in, 3H)
        w3 = w_t.reshape(w_t.shape[0], 3, H)
        w3 = jnp.pad(w3, ((0, in_pad - w_t.shape[0]), (0, 0), (0, Hp - H)))
        return w3.reshape(in_pad, 3 * Hp)

    w_ih_p = gate_pad_t(params["w_ih"], I).astype(matmul_dtype)     # (I, 3Hp)
    w_hh_p = gate_pad_t(params["w_hh"], Hp).astype(recurrent_dtype)  # (Hp, 3Hp)

    b_ih3 = jnp.pad(params["b_ih"].reshape(3, H), ((0, 0), (0, Hp - H)))
    b_hh3 = jnp.pad(params["b_hh"].reshape(3, H), ((0, 0), (0, Hp - H)))
    # Fold b_ih (all gates) + b_hh (r,z gates) into the hoisted projection; the
    # n-gate hidden bias stays separate (it sits inside the r * (...) term).
    b_gx = (b_ih3 + b_hh3.at[2].set(0.0)).reshape(1, 3 * Hp).astype(f32)
    b_hn_b = jnp.broadcast_to(b_hh3[2], (CB, Hp)).astype(f32)

    w1_p = jnp.pad(params["w1"].T, ((0, Hp - H), (0, Hp - H))).astype(matmul_dtype)
    b1_b = jnp.pad(params["b1"], (0, Hp - H)).reshape(1, Hp).astype(f32)
    w2_b = jnp.pad(params["w2"].reshape(-1), (0, Hp - H)).reshape(1, Hp).astype(f32)
    b2_b = jnp.broadcast_to(params["b2"].reshape(1, 1), (1, TB)).astype(f32)

    # --- x: cast to matmul dtype first (halves the layout-shuffle traffic),
    #     zero-pad batch, lay each batch tile out as a time-major 2-D slab.
    xm = x.astype(matmul_dtype)
    xp = jnp.pad(xm, ((0, Bp - B), (0, 0), (0, 0)))                 # (Bp, T, I)
    x2d = (xp.reshape(n_tiles, TB, T, I)
             .transpose(0, 2, 1, 3)
             .reshape(n_tiles * T * TB, I))

    kernel = functools.partial(gru_fc_kernel, seq_len=T, batch_tile=TB,
                               hidden_pad=Hp, n_chains=n_chains,
                               time_chunk=time_chunk)
    fixed = lambda i: (0, 0)                  # weights/biases: same block

    out = pl.pallas_call(
        kernel,
        out_shape=jax.ShapeDtypeStruct((n_tiles * 8, TB), f32),
        grid=(n_tiles,),
        in_specs=[
            pl.BlockSpec((T * TB, I), lambda i: (i, 0)),   # x (per batch tile)
            pl.BlockSpec((I, 3 * Hp), fixed),              # w_ih
            pl.BlockSpec((Hp, 3 * Hp), fixed),             # w_hh
            pl.BlockSpec((1, 3 * Hp), fixed),              # b_gx (folded biases)
            pl.BlockSpec((CB, Hp), fixed),                 # b_hn (pre-broadcast)
            pl.BlockSpec((Hp, Hp), fixed),                 # w1
            pl.BlockSpec((1, Hp), fixed),                  # b1
            pl.BlockSpec((1, Hp), fixed),                  # w2 row
            pl.BlockSpec((1, TB), fixed),                  # b2 (lane row)
        ],
        out_specs=pl.BlockSpec((8, TB), lambda i: (i, 0)),  # lane-dense block
        compiler_params=pltpu.CompilerParams(
            dimension_semantics=("parallel",)),             # megacore on v7x
    )(x2d, w_ih_p, w_hh_p, b_gx, b_hn_b, w1_p, b1_b, w2_b, b2_b)

    out = out.reshape(n_tiles, 8, TB)[:, 0, :].reshape(Bp, 1)
    return out[:B]


def init_params(key, input_size, hidden_size):
    """Deterministic synthetic parameters in PyTorch layout / init ranges."""
    H, I = hidden_size, input_size
    ks = jax.random.split(key, 8)
    s = 1.0 / jnp.sqrt(H)

    def u(k, shape):
        return jax.random.uniform(k, shape, jnp.float32, -s, s)

    return dict(
        w_ih=u(ks[0], (3 * H, I)),    # GRU weight_ih_l0, gate order r,z,n
        w_hh=u(ks[1], (3 * H, H)),    # GRU weight_hh_l0
        b_ih=u(ks[2], (3 * H,)),
        b_hh=u(ks[3], (3 * H,)),
        w1=u(ks[4], (H, H)),          # fc Linear(H,H) weight (out,in)
        b1=u(ks[5], (H,)),
        w2=u(ks[6], (1, H)),          # fc Linear(H,1) weight
        b2=u(ks[7], (1,)),
    )


def reference_forward(x, p):
    """Pure-JAX f32 reference of the same math (PyTorch GRU semantics)."""
    B, T, I = x.shape
    H = p["w_hh"].shape[1]
    w_ih_t, w_hh_t = p["w_ih"].T, p["w_hh"].T
    h = jnp.zeros((B, H), jnp.float32)
    for t in range(T):
        gx = x[:, t, :] @ w_ih_t + p["b_ih"]
        gh = h @ w_hh_t + p["b_hh"]
        r = jax.nn.sigmoid(gx[:, :H] + gh[:, :H])
        z = jax.nn.sigmoid(gx[:, H:2 * H] + gh[:, H:2 * H])
        n = jnp.tanh(gx[:, 2 * H:] + r * gh[:, 2 * H:])
        h = (1.0 - z) * n + z * h
    fc1 = jnp.maximum(h @ p["w1"].T + p["b1"], 0.0)
    return fc1 @ p["w2"].T + p["b2"]


if __name__ == "__main__":
    key = jax.random.PRNGKey(0)
    fwd = jax.jit(independent_gru_forward,
                  static_argnames=("matmul_dtype", "recurrent_dtype"))

    # Config 1: module-default toy sizes (single tile, single chain).
    # Config 2: larger batch -> 2-tile parallel grid + 2 interleaved chains.
    for (batch, seq, input_size, hidden_size) in [(4, 8, 16, 32),
                                                  (40, 12, 16, 48)]:
        k_x, k_p, key = jax.random.split(key, 3)
        x = jax.random.normal(k_x, (batch, seq, input_size), jnp.float32)
        params = init_params(k_p, input_size, hidden_size)
        ref = reference_forward(x, params)

        # f32-everything path: tight structural check against the reference.
        out_f32 = jax.block_until_ready(
            fwd(x, params, matmul_dtype=jnp.float32,
                recurrent_dtype=jnp.float32))
        assert out_f32.shape == (batch, 1), out_f32.shape
        assert jnp.allclose(out_f32, ref, atol=1e-4, rtol=1e-4), (
            batch, float(jnp.max(jnp.abs(out_f32 - ref))))

        # Default fast path: bf16 projection / fc matmuls, f32 recurrence.
        out = jax.block_until_ready(fwd(x, params))
        assert out.shape == (batch, 1), out.shape
        assert jnp.allclose(out, ref, atol=5e-2, rtol=5e-2), (
            batch, float(jnp.max(jnp.abs(out - ref))))

    print("KERNEL_OK")
</pallas_src>

<mosaic_0001>
module attributes {stable_mosaic.version = 11 : i64} {
  func.func @gru_fc_kernel(%arg0: i32, %arg1: memref<64x16xf32, #tpu.memory_space<vmem>>, %arg2: memref<16x384xf32, #tpu.memory_space<vmem>>, %arg3: memref<128x384xf32, #tpu.memory_space<vmem>>, %arg4: memref<1x384xf32, #tpu.memory_space<vmem>>, %arg5: memref<8x128xf32, #tpu.memory_space<vmem>>, %arg6: memref<128x128xf32, #tpu.memory_space<vmem>>, %arg7: memref<1x128xf32, #tpu.memory_space<vmem>>, %arg8: memref<1x128xf32, #tpu.memory_space<vmem>>, %arg9: memref<1x8xf32, #tpu.memory_space<vmem>>, %arg10: memref<8x8xf32, #tpu.memory_space<vmem>>) attributes {dimension_semantics = [#tpu.dimension_semantics<parallel>], iteration_bounds = array<i64: 1>, scalar_prefetch = 0 : i64, scratch_operands = 0 : i64, tpu.core_type = #tpu.core_type<tc>, window_params = [{transform_indices = @transform_0, window_bounds = array<i64: 64, 16>}, {pipeline_mode = #tpu.pipeline_mode<synchronous>, transform_indices = @transform_1, window_bounds = array<i64: 16, 384>}, {pipeline_mode = #tpu.pipeline_mode<synchronous>, transform_indices = @transform_2, window_bounds = array<i64: 128, 384>}, {pipeline_mode = #tpu.pipeline_mode<synchronous>, transform_indices = @transform_3, window_bounds = array<i64: 1, 384>}, {pipeline_mode = #tpu.pipeline_mode<synchronous>, transform_indices = @transform_4, window_bounds = array<i64: 8, 128>}, {pipeline_mode = #tpu.pipeline_mode<synchronous>, transform_indices = @transform_5, window_bounds = array<i64: 128, 128>}, {pipeline_mode = #tpu.pipeline_mode<synchronous>, transform_indices = @transform_6, window_bounds = array<i64: 1, 128>}, {pipeline_mode = #tpu.pipeline_mode<synchronous>, transform_indices = @transform_7, window_bounds = array<i64: 1, 128>}, {pipeline_mode = #tpu.pipeline_mode<synchronous>, transform_indices = @transform_8, window_bounds = array<i64: 1, 8>}, {transform_indices = @transform_9, window_bounds = array<i64: 8, 8>}]} {
    %c0 = arith.constant 0 : index
    %c0_0 = arith.constant 0 : index
    %0 = vector.load %arg2[%c0, %c0_0] : memref<16x384xf32, #tpu.memory_space<vmem>>, vector<16x384xf32>
    %c0_1 = arith.constant 0 : index
    %c0_2 = arith.constant 0 : index
    %1 = vector.load %arg3[%c0_1, %c0_2] : memref<128x384xf32, #tpu.memory_space<vmem>>, vector<128x384xf32>
    %c0_3 = arith.constant 0 : index
    %c0_4 = arith.constant 0 : index
    %2 = vector.load %arg4[%c0_3, %c0_4] : memref<1x384xf32, #tpu.memory_space<vmem>>, vector<1x384xf32>
    %c0_5 = arith.constant 0 : index
    %c0_6 = arith.constant 0 : index
    %3 = vector.load %arg5[%c0_5, %c0_6] : memref<8x128xf32, #tpu.memory_space<vmem>>, vector<8x128xf32>
    %cst = arith.constant 0.000000e+00 : f32
    %4 = vector.broadcast %cst : f32 to vector<8x128xf32>
    %c0_7 = arith.constant 0 : index
    %c0_8 = arith.constant 0 : index
    %5 = vector.load %arg1[%c0_7, %c0_8] : memref<64x16xf32, #tpu.memory_space<vmem>>, vector<64x16xf32>
    %cst_9 = arith.constant dense<0.000000e+00> : vector<64x384xf32>
    %6 = tpu.matmul %5, %0, %cst_9 {dimension_numbers = #tpu.dot_dimension_numbers<[1], [0], [0], [1], [0, 0, 1, 1], [], []>} : vector<64x16xf32>, vector<16x384xf32>, vector<64x384xf32> -> vector<64x384xf32>
    %7 = vector.broadcast %2 : vector<1x384xf32> to vector<64x384xf32>
    %8 = arith.addf %6, %7 : vector<64x384xf32>
    %9 = vector.extract_strided_slice %8 {offsets = [0, 0], sizes = [8, 384], strides = [1, 1]} : vector<64x384xf32> to vector<8x384xf32>
    %cst_10 = arith.constant dense<0.000000e+00> : vector<8x384xf32>
    %10 = tpu.matmul %4, %1, %cst_10 {dimension_numbers = #tpu.dot_dimension_numbers<[1], [0], [0], [1], [0, 0, 1, 1], [], []>} : vector<8x128xf32>, vector<128x384xf32>, vector<8x384xf32> -> vector<8x384xf32>
    %11 = vector.extract_strided_slice %9 {offsets = [0, 0], sizes = [8, 128], strides = [1, 1]} : vector<8x384xf32> to vector<8x128xf32>
    %12 = vector.extract_strided_slice %10 {offsets = [0, 0], sizes = [8, 128], strides = [1, 1]} : vector<8x384xf32> to vector<8x128xf32>
    %13 = arith.addf %11, %12 : vector<8x128xf32>
    %14 = arith.negf %13 : vector<8x128xf32>
    %15 = math.exp %14 : vector<8x128xf32>
    %cst_11 = arith.constant 1.000000e+00 : f32
    %16 = vector.broadcast %cst_11 : f32 to vector<8x128xf32>
    %17 = arith.addf %16, %15 : vector<8x128xf32>
    %18 = arith.divf %16, %17 : vector<8x128xf32>
    %19 = vector.extract_strided_slice %9 {offsets = [0, 128], sizes = [8, 128], strides = [1, 1]} : vector<8x384xf32> to vector<8x128xf32>
    %20 = vector.extract_strided_slice %10 {offsets = [0, 128], sizes = [8, 128], strides = [1, 1]} : vector<8x384xf32> to vector<8x128xf32>
    %21 = arith.addf %19, %20 : vector<8x128xf32>
    %22 = arith.negf %21 : vector<8x128xf32>
    %23 = math.exp %22 : vector<8x128xf32>
    %cst_12 = arith.constant 1.000000e+00 : f32
    %24 = vector.broadcast %cst_12 : f32 to vector<8x128xf32>
    %25 = arith.addf %24, %23 : vector<8x128xf32>
    %26 = arith.divf %24, %25 : vector<8x128xf32>
    %27 = vector.extract_strided_slice %9 {offsets = [0, 256], sizes = [8, 128], strides = [1, 1]} : vector<8x384xf32> to vector<8x128xf32>
    %28 = vector.extract_strided_slice %10 {offsets = [0, 256], sizes = [8, 128], strides = [1, 1]} : vector<8x384xf32> to vector<8x128xf32>
    %29 = arith.addf %28, %3 : vector<8x128xf32>
    %30 = arith.mulf %18, %29 : vector<8x128xf32>
    %31 = arith.addf %27, %30 : vector<8x128xf32>
    %32 = math.tanh %31 : vector<8x128xf32>
    %cst_13 = arith.constant 1.000000e+00 : f32
    %33 = vector.broadcast %cst_13 : f32 to vector<8x128xf32>
    %34 = arith.subf %33, %26 : vector<8x128xf32>
    %35 = arith.mulf %34, %32 : vector<8x128xf32>
    %36 = arith.mulf %26, %4 : vector<8x128xf32>
    %37 = arith.addf %35, %36 : vector<8x128xf32>
    %38 = vector.extract_strided_slice %8 {offsets = [8, 0], sizes = [8, 384], strides = [1, 1]} : vector<64x384xf32> to vector<8x384xf32>
    %cst_14 = arith.constant dense<0.000000e+00> : vector<8x384xf32>
    %39 = tpu.matmul %37, %1, %cst_14 {dimension_numbers = #tpu.dot_dimension_numbers<[1], [0], [0], [1], [0, 0, 1, 1], [], []>} : vector<8x128xf32>, vector<128x384xf32>, vector<8x384xf32> -> vector<8x384xf32>
    %40 = vector.extract_strided_slice %38 {offsets = [0, 0], sizes = [8, 128], strides = [1, 1]} : vector<8x384xf32> to vector<8x128xf32>
    %41 = vector.extract_strided_slice %39 {offsets = [0, 0], sizes = [8, 128], strides = [1, 1]} : vector<8x384xf32> to vector<8x128xf32>
    %42 = arith.addf %40, %41 : vector<8x128xf32>
    %43 = arith.negf %42 : vector<8x128xf32>
    %44 = math.exp %43 : vector<8x128xf32>
    %cst_15 = arith.constant 1.000000e+00 : f32
    %45 = vector.broadcast %cst_15 : f32 to vector<8x128xf32>
    %46 = arith.addf %45, %44 : vector<8x128xf32>
    %47 = arith.divf %45, %46 : vector<8x128xf32>
    %48 = vector.extract_strided_slice %38 {offsets = [0, 128], sizes = [8, 128], strides = [1, 1]} : vector<8x384xf32> to vector<8x128xf32>
    %49 = vector.extract_strided_slice %39 {offsets = [0, 128], sizes = [8, 128], strides = [1, 1]} : vector<8x384xf32> to vector<8x128xf32>
    %50 = arith.addf %48, %49 : vector<8x128xf32>
    %51 = arith.negf %50 : vector<8x128xf32>
    %52 = math.exp %51 : vector<8x128xf32>
    %cst_16 = arith.constant 1.000000e+00 : f32
    %53 = vector.broadcast %cst_16 : f32 to vector<8x128xf32>
    %54 = arith.addf %53, %52 : vector<8x128xf32>
    %55 = arith.divf %53, %54 : vector<8x128xf32>
    %56 = vector.extract_strided_slice %38 {offsets = [0, 256], sizes = [8, 128], strides = [1, 1]} : vector<8x384xf32> to vector<8x128xf32>
    %57 = vector.extract_strided_slice %39 {offsets = [0, 256], sizes = [8, 128], strides = [1, 1]} : vector<8x384xf32> to vector<8x128xf32>
    %58 = arith.addf %57, %3 : vector<8x128xf32>
    %59 = arith.mulf %47, %58 : vector<8x128xf32>
    %60 = arith.addf %56, %59 : vector<8x128xf32>
    %61 = math.tanh %60 : vector<8x128xf32>
    %cst_17 = arith.constant 1.000000e+00 : f32
    %62 = vector.broadcast %cst_17 : f32 to vector<8x128xf32>
    %63 = arith.subf %62, %55 : vector<8x128xf32>
    %64 = arith.mulf %63, %61 : vector<8x128xf32>
    %65 = arith.mulf %55, %37 : vector<8x128xf32>
    %66 = arith.addf %64, %65 : vector<8x128xf32>
    %67 = vector.extract_strided_slice %8 {offsets = [16, 0], sizes = [8, 384], strides = [1, 1]} : vector<64x384xf32> to vector<8x384xf32>
    %cst_18 = arith.constant dense<0.000000e+00> : vector<8x384xf32>
    %68 = tpu.matmul %66, %1, %cst_18 {dimension_numbers = #tpu.dot_dimension_numbers<[1], [0], [0], [1], [0, 0, 1, 1], [], []>} : vector<8x128xf32>, vector<128x384xf32>, vector<8x384xf32> -> vector<8x384xf32>
    %69 = vector.extract_strided_slice %67 {offsets = [0, 0], sizes = [8, 128], strides = [1, 1]} : vector<8x384xf32> to vector<8x128xf32>
    %70 = vector.extract_strided_slice %68 {offsets = [0, 0], sizes = [8, 128], strides = [1, 1]} : vector<8x384xf32> to vector<8x128xf32>
    %71 = arith.addf %69, %70 : vector<8x128xf32>
    %72 = arith.negf %71 : vector<8x128xf32>
    %73 = math.exp %72 : vector<8x128xf32>
    %cst_19 = arith.constant 1.000000e+00 : f32
    %74 = vector.broadcast %cst_19 : f32 to vector<8x128xf32>
    %75 = arith.addf %74, %73 : vector<8x128xf32>
    %76 = arith.divf %74, %75 : vector<8x128xf32>
    %77 = vector.extract_strided_slice %67 {offsets = [0, 128], sizes = [8, 128], strides = [1, 1]} : vector<8x384xf32> to vector<8x128xf32>
    %78 = vector.extract_strided_slice %68 {offsets = [0, 128], sizes = [8, 128], strides = [1, 1]} : vector<8x384xf32> to vector<8x128xf32>
    %79 = arith.addf %77, %78 : vector<8x128xf32>
    %80 = arith.negf %79 : vector<8x128xf32>
    %81 = math.exp %80 : vector<8x128xf32>
    %cst_20 = arith.constant 1.000000e+00 : f32
    %82 = vector.broadcast %cst_20 : f32 to vector<8x128xf32>
    %83 = arith.addf %82, %81 : vector<8x128xf32>
    %84 = arith.divf %82, %83 : vector<8x128xf32>
    %85 = vector.extract_strided_slice %67 {offsets = [0, 256], sizes = [8, 128], strides = [1, 1]} : vector<8x384xf32> to vector<8x128xf32>
    %86 = vector.extract_strided_slice %68 {offsets = [0, 256], sizes = [8, 128], strides = [1, 1]} : vector<8x384xf32> to vector<8x128xf32>
    %87 = arith.addf %86, %3 : vector<8x128xf32>
    %88 = arith.mulf %76, %87 : vector<8x128xf32>
    %89 = arith.addf %85, %88 : vector<8x128xf32>
    %90 = math.tanh %89 : vector<8x128xf32>
    %cst_21 = arith.constant 1.000000e+00 : f32
    %91 = vector.broadcast %cst_21 : f32 to vector<8x128xf32>
    %92 = arith.subf %91, %84 : vector<8x128xf32>
    %93 = arith.mulf %92, %90 : vector<8x128xf32>
    %94 = arith.mulf %84, %66 : vector<8x128xf32>
    %95 = arith.addf %93, %94 : vector<8x128xf32>
    %96 = vector.extract_strided_slice %8 {offsets = [24, 0], sizes = [8, 384], strides = [1, 1]} : vector<64x384xf32> to vector<8x384xf32>
    %cst_22 = arith.constant dense<0.000000e+00> : vector<8x384xf32>
    %97 = tpu.matmul %95, %1, %cst_22 {dimension_numbers = #tpu.dot_dimension_numbers<[1], [0], [0], [1], [0, 0, 1, 1], [], []>} : vector<8x128xf32>, vector<128x384xf32>, vector<8x384xf32> -> vector<8x384xf32>
    %98 = vector.extract_strided_slice %96 {offsets = [0, 0], sizes = [8, 128], strides = [1, 1]} : vector<8x384xf32> to vector<8x128xf32>
    %99 = vector.extract_strided_slice %97 {offsets = [0, 0], sizes = [8, 128], strides = [1, 1]} : vector<8x384xf32> to vector<8x128xf32>
    %100 = arith.addf %98, %99 : vector<8x128xf32>
    %101 = arith.negf %100 : vector<8x128xf32>
    %102 = math.exp %101 : vector<8x128xf32>
    %cst_23 = arith.constant 1.000000e+00 : f32
    %103 = vector.broadcast %cst_23 : f32 to vector<8x128xf32>
    %104 = arith.addf %103, %102 : vector<8x128xf32>
    %105 = arith.divf %103, %104 : vector<8x128xf32>
    %106 = vector.extract_strided_slice %96 {offsets = [0, 128], sizes = [8, 128], strides = [1, 1]} : vector<8x384xf32> to vector<8x128xf32>
    %107 = vector.extract_strided_slice %97 {offsets = [0, 128], sizes = [8, 128], strides = [1, 1]} : vector<8x384xf32> to vector<8x128xf32>
    %108 = arith.addf %106, %107 : vector<8x128xf32>
    %109 = arith.negf %108 : vector<8x128xf32>
    %110 = math.exp %109 : vector<8x128xf32>
    %cst_24 = arith.constant 1.000000e+00 : f32
    %111 = vector.broadcast %cst_24 : f32 to vector<8x128xf32>
    %112 = arith.addf %111, %110 : vector<8x128xf32>
    %113 = arith.divf %111, %112 : vector<8x128xf32>
    %114 = vector.extract_strided_slice %96 {offsets = [0, 256], sizes = [8, 128], strides = [1, 1]} : vector<8x384xf32> to vector<8x128xf32>
    %115 = vector.extract_strided_slice %97 {offsets = [0, 256], sizes = [8, 128], strides = [1, 1]} : vector<8x384xf32> to vector<8x128xf32>
    %116 = arith.addf %115, %3 : vector<8x128xf32>
    %117 = arith.mulf %105, %116 : vector<8x128xf32>
    %118 = arith.addf %114, %117 : vector<8x128xf32>
    %119 = math.tanh %118 : vector<8x128xf32>
    %cst_25 = arith.constant 1.000000e+00 : f32
    %120 = vector.broadcast %cst_25 : f32 to vector<8x128xf32>
    %121 = arith.subf %120, %113 : vector<8x128xf32>
    %122 = arith.mulf %121, %119 : vector<8x128xf32>
    %123 = arith.mulf %113, %95 : vector<8x128xf32>
    %124 = arith.addf %122, %123 : vector<8x128xf32>
    %125 = vector.extract_strided_slice %8 {offsets = [32, 0], sizes = [8, 384], strides = [1, 1]} : vector<64x384xf32> to vector<8x384xf32>
    %cst_26 = arith.constant dense<0.000000e+00> : vector<8x384xf32>
    %126 = tpu.matmul %124, %1, %cst_26 {dimension_numbers = #tpu.dot_dimension_numbers<[1], [0], [0], [1], [0, 0, 1, 1], [], []>} : vector<8x128xf32>, vector<128x384xf32>, vector<8x384xf32> -> vector<8x384xf32>
    %127 = vector.extract_strided_slice %125 {offsets = [0, 0], sizes = [8, 128], strides = [1, 1]} : vector<8x384xf32> to vector<8x128xf32>
    %128 = vector.extract_strided_slice %126 {offsets = [0, 0], sizes = [8, 128], strides = [1, 1]} : vector<8x384xf32> to vector<8x128xf32>
    %129 = arith.addf %127, %128 : vector<8x128xf32>
    %130 = arith.negf %129 : vector<8x128xf32>
    %131 = math.exp %130 : vector<8x128xf32>
    %cst_27 = arith.constant 1.000000e+00 : f32
    %132 = vector.broadcast %cst_27 : f32 to vector<8x128xf32>
    %133 = arith.addf %132, %131 : vector<8x128xf32>
    %134 = arith.divf %132, %133 : vector<8x128xf32>
    %135 = vector.extract_strided_slice %125 {offsets = [0, 128], sizes = [8, 128], strides = [1, 1]} : vector<8x384xf32> to vector<8x128xf32>
    %136 = vector.extract_strided_slice %126 {offsets = [0, 128], sizes = [8, 128], strides = [1, 1]} : vector<8x384xf32> to vector<8x128xf32>
    %137 = arith.addf %135, %136 : vector<8x128xf32>
    %138 = arith.negf %137 : vector<8x128xf32>
    %139 = math.exp %138 : vector<8x128xf32>
    %cst_28 = arith.constant 1.000000e+00 : f32
    %140 = vector.broadcast %cst_28 : f32 to vector<8x128xf32>
    %141 = arith.addf %140, %139 : vector<8x128xf32>
    %142 = arith.divf %140, %141 : vector<8x128xf32>
    %143 = vector.extract_strided_slice %125 {offsets = [0, 256], sizes = [8, 128], strides = [1, 1]} : vector<8x384xf32> to vector<8x128xf32>
    %144 = vector.extract_strided_slice %126 {offsets = [0, 256], sizes = [8, 128], strides = [1, 1]} : vector<8x384xf32> to vector<8x128xf32>
    %145 = arith.addf %144, %3 : vector<8x128xf32>
    %146 = arith.mulf %134, %145 : vector<8x128xf32>
    %147 = arith.addf %143, %146 : vector<8x128xf32>
    %148 = math.tanh %147 : vector<8x128xf32>
    %cst_29 = arith.constant 1.000000e+00 : f32
    %149 = vector.broadcast %cst_29 : f32 to vector<8x128xf32>
    %150 = arith.subf %149, %142 : vector<8x128xf32>
    %151 = arith.mulf %150, %148 : vector<8x128xf32>
    %152 = arith.mulf %142, %124 : vector<8x128xf32>
    %153 = arith.addf %151, %152 : vector<8x128xf32>
    %154 = vector.extract_strided_slice %8 {offsets = [40, 0], sizes = [8, 384], strides = [1, 1]} : vector<64x384xf32> to vector<8x384xf32>
    %cst_30 = arith.constant dense<0.000000e+00> : vector<8x384xf32>
    %155 = tpu.matmul %153, %1, %cst_30 {dimension_numbers = #tpu.dot_dimension_numbers<[1], [0], [0], [1], [0, 0, 1, 1], [], []>} : vector<8x128xf32>, vector<128x384xf32>, vector<8x384xf32> -> vector<8x384xf32>
    %156 = vector.extract_strided_slice %154 {offsets = [0, 0], sizes = [8, 128], strides = [1, 1]} : vector<8x384xf32> to vector<8x128xf32>
    %157 = vector.extract_strided_slice %155 {offsets = [0, 0], sizes = [8, 128], strides = [1, 1]} : vector<8x384xf32> to vector<8x128xf32>
    %158 = arith.addf %156, %157 : vector<8x128xf32>
    %159 = arith.negf %158 : vector<8x128xf32>
    %160 = math.exp %159 : vector<8x128xf32>
    %cst_31 = arith.constant 1.000000e+00 : f32
    %161 = vector.broadcast %cst_31 : f32 to vector<8x128xf32>
    %162 = arith.addf %161, %160 : vector<8x128xf32>
    %163 = arith.divf %161, %162 : vector<8x128xf32>
    %164 = vector.extract_strided_slice %154 {offsets = [0, 128], sizes = [8, 128], strides = [1, 1]} : vector<8x384xf32> to vector<8x128xf32>
    %165 = vector.extract_strided_slice %155 {offsets = [0, 128], sizes = [8, 128], strides = [1, 1]} : vector<8x384xf32> to vector<8x128xf32>
    %166 = arith.addf %164, %165 : vector<8x128xf32>
    %167 = arith.negf %166 : vector<8x128xf32>
    %168 = math.exp %167 : vector<8x128xf32>
    %cst_32 = arith.constant 1.000000e+00 : f32
    %169 = vector.broadcast %cst_32 : f32 to vector<8x128xf32>
    %170 = arith.addf %169, %168 : vector<8x128xf32>
    %171 = arith.divf %169, %170 : vector<8x128xf32>
    %172 = vector.extract_strided_slice %154 {offsets = [0, 256], sizes = [8, 128], strides = [1, 1]} : vector<8x384xf32> to vector<8x128xf32>
    %173 = vector.extract_strided_slice %155 {offsets = [0, 256], sizes = [8, 128], strides = [1, 1]} : vector<8x384xf32> to vector<8x128xf32>
    %174 = arith.addf %173, %3 : vector<8x128xf32>
    %175 = arith.mulf %163, %174 : vector<8x128xf32>
    %176 = arith.addf %172, %175 : vector<8x128xf32>
    %177 = math.tanh %176 : vector<8x128xf32>
    %cst_33 = arith.constant 1.000000e+00 : f32
    %178 = vector.broadcast %cst_33 : f32 to vector<8x128xf32>
    %179 = arith.subf %178, %171 : vector<8x128xf32>
    %180 = arith.mulf %179, %177 : vector<8x128xf32>
    %181 = arith.mulf %171, %153 : vector<8x128xf32>
    %182 = arith.addf %180, %181 : vector<8x128xf32>
    %183 = vector.extract_strided_slice %8 {offsets = [48, 0], sizes = [8, 384], strides = [1, 1]} : vector<64x384xf32> to vector<8x384xf32>
    %cst_34 = arith.constant dense<0.000000e+00> : vector<8x384xf32>
    %184 = tpu.matmul %182, %1, %cst_34 {dimension_numbers = #tpu.dot_dimension_numbers<[1], [0], [0], [1], [0, 0, 1, 1], [], []>} : vector<8x128xf32>, vector<128x384xf32>, vector<8x384xf32> -> vector<8x384xf32>
    %185 = vector.extract_strided_slice %183 {offsets = [0, 0], sizes = [8, 128], strides = [1, 1]} : vector<8x384xf32> to vector<8x128xf32>
    %186 = vector.extract_strided_slice %184 {offsets = [0, 0], sizes = [8, 128], strides = [1, 1]} : vector<8x384xf32> to vector<8x128xf32>
    %187 = arith.addf %185, %186 : vector<8x128xf32>
    %188 = arith.negf %187 : vector<8x128xf32>
    %189 = math.exp %188 : vector<8x128xf32>
    %cst_35 = arith.constant 1.000000e+00 : f32
    %190 = vector.broadcast %cst_35 : f32 to vector<8x128xf32>
    %191 = arith.addf %190, %189 : vector<8x128xf32>
    %192 = arith.divf %190, %191 : vector<8x128xf32>
    %193 = vector.extract_strided_slice %183 {offsets = [0, 128], sizes = [8, 128], strides = [1, 1]} : vector<8x384xf32> to vector<8x128xf32>
    %194 = vector.extract_strided_slice %184 {offsets = [0, 128], sizes = [8, 128], strides = [1, 1]} : vector<8x384xf32> to vector<8x128xf32>
    %195 = arith.addf %193, %194 : vector<8x128xf32>
    %196 = arith.negf %195 : vector<8x128xf32>
    %197 = math.exp %196 : vector<8x128xf32>
    %cst_36 = arith.constant 1.000000e+00 : f32
    %198 = vector.broadcast %cst_36 : f32 to vector<8x128xf32>
    %199 = arith.addf %198, %197 : vector<8x128xf32>
    %200 = arith.divf %198, %199 : vector<8x128xf32>
    %201 = vector.extract_strided_slice %183 {offsets = [0, 256], sizes = [8, 128], strides = [1, 1]} : vector<8x384xf32> to vector<8x128xf32>
    %202 = vector.extract_strided_slice %184 {offsets = [0, 256], sizes = [8, 128], strides = [1, 1]} : vector<8x384xf32> to vector<8x128xf32>
    %203 = arith.addf %202, %3 : vector<8x128xf32>
    %204 = arith.mulf %192, %203 : vector<8x128xf32>
    %205 = arith.addf %201, %204 : vector<8x128xf32>
    %206 = math.tanh %205 : vector<8x128xf32>
    %cst_37 = arith.constant 1.000000e+00 : f32
    %207 = vector.broadcast %cst_37 : f32 to vector<8x128xf32>
    %208 = arith.subf %207, %200 : vector<8x128xf32>
    %209 = arith.mulf %208, %206 : vector<8x128xf32>
    %210 = arith.mulf %200, %182 : vector<8x128xf32>
    %211 = arith.addf %209, %210 : vector<8x128xf32>
    %212 = vector.extract_strided_slice %8 {offsets = [56, 0], sizes = [8, 384], strides = [1, 1]} : vector<64x384xf32> to vector<8x384xf32>
    %cst_38 = arith.constant dense<0.000000e+00> : vector<8x384xf32>
    %213 = tpu.matmul %211, %1, %cst_38 {dimension_numbers = #tpu.dot_dimension_numbers<[1], [0], [0], [1], [0, 0, 1, 1], [], []>} : vector<8x128xf32>, vector<128x384xf32>, vector<8x384xf32> -> vector<8x384xf32>
    %214 = vector.extract_strided_slice %212 {offsets = [0, 0], sizes = [8, 128], strides = [1, 1]} : vector<8x384xf32> to vector<8x128xf32>
    %215 = vector.extract_strided_slice %213 {offsets = [0, 0], sizes = [8, 128], strides = [1, 1]} : vector<8x384xf32> to vector<8x128xf32>
    %216 = arith.addf %214, %215 : vector<8x128xf32>
    %217 = arith.negf %216 : vector<8x128xf32>
    %218 = math.exp %217 : vector<8x128xf32>
    %cst_39 = arith.constant 1.000000e+00 : f32
    %219 = vector.broadcast %cst_39 : f32 to vector<8x128xf32>
    %220 = arith.addf %219, %218 : vector<8x128xf32>
    %221 = arith.divf %219, %220 : vector<8x128xf32>
    %222 = vector.extract_strided_slice %212 {offsets = [0, 128], sizes = [8, 128], strides = [1, 1]} : vector<8x384xf32> to vector<8x128xf32>
    %223 = vector.extract_strided_slice %213 {offsets = [0, 128], sizes = [8, 128], strides = [1, 1]} : vector<8x384xf32> to vector<8x128xf32>
    %224 = arith.addf %222, %223 : vector<8x128xf32>
    %225 = arith.negf %224 : vector<8x128xf32>
    %226 = math.exp %225 : vector<8x128xf32>
    %cst_40 = arith.constant 1.000000e+00 : f32
    %227 = vector.broadcast %cst_40 : f32 to vector<8x128xf32>
    %228 = arith.addf %227, %226 : vector<8x128xf32>
    %229 = arith.divf %227, %228 : vector<8x128xf32>
    %230 = vector.extract_strided_slice %212 {offsets = [0, 256], sizes = [8, 128], strides = [1, 1]} : vector<8x384xf32> to vector<8x128xf32>
    %231 = vector.extract_strided_slice %213 {offsets = [0, 256], sizes = [8, 128], strides = [1, 1]} : vector<8x384xf32> to vector<8x128xf32>
    %232 = arith.addf %231, %3 : vector<8x128xf32>
    %233 = arith.mulf %221, %232 : vector<8x128xf32>
    %234 = arith.addf %230, %233 : vector<8x128xf32>
    %235 = math.tanh %234 : vector<8x128xf32>
    %cst_41 = arith.constant 1.000000e+00 : f32
    %236 = vector.broadcast %cst_41 : f32 to vector<8x128xf32>
    %237 = arith.subf %236, %229 : vector<8x128xf32>
    %238 = arith.mulf %237, %235 : vector<8x128xf32>
    %239 = arith.mulf %229, %211 : vector<8x128xf32>
    %240 = arith.addf %238, %239 : vector<8x128xf32>
    %c0_42 = arith.constant 0 : index
    %c0_43 = arith.constant 0 : index
    %241 = vector.load %arg6[%c0_42, %c0_43] : memref<128x128xf32, #tpu.memory_space<vmem>>, vector<128x128xf32>
    %cst_44 = arith.constant dense<0.000000e+00> : vector<8x128xf32>
    %242 = tpu.matmul %240, %241, %cst_44 {dimension_numbers = #tpu.dot_dimension_numbers<[1], [0], [0], [1], [0, 0, 1, 1], [], []>} : vector<8x128xf32>, vector<128x128xf32>, vector<8x128xf32> -> vector<8x128xf32>
    %c0_45 = arith.constant 0 : index
    %c0_46 = arith.constant 0 : index
    %243 = vector.load %arg7[%c0_45, %c0_46] : memref<1x128xf32, #tpu.memory_space<vmem>>, vector<1x128xf32>
    %244 = vector.broadcast %243 : vector<1x128xf32> to vector<8x128xf32>
    %245 = arith.addf %242, %244 : vector<8x128xf32>
    %cst_47 = arith.constant 0.000000e+00 : f32
    %246 = vector.broadcast %cst_47 : f32 to vector<8x128xf32>
    %247 = arith.maximumf %245, %246 : vector<8x128xf32>
    %c0_48 = arith.constant 0 : index
    %c0_49 = arith.constant 0 : index
    %248 = vector.load %arg8[%c0_48, %c0_49] : memref<1x128xf32, #tpu.memory_space<vmem>>, vector<1x128xf32>
    %249 = vector.broadcast %248 : vector<1x128xf32> to vector<8x128xf32>
    %250 = arith.mulf %247, %249 : vector<8x128xf32>
    %cst_50 = arith.constant dense<0.000000e+00> : vector<8xf32>
    %251 = vector.multi_reduction <add>, %250, %cst_50 [1] : vector<8x128xf32> to vector<8xf32>
    %252 = vector.shape_cast %251 : vector<8xf32> to vector<1x8xf32>
    %c0_51 = arith.constant 0 : index
    %c0_52 = arith.constant 0 : index
    %253 = vector.load %arg9[%c0_51, %c0_52] : memref<1x8xf32, #tpu.memory_space<vmem>>, vector<1x8xf32>
    %254 = arith.addf %252, %253 : vector<1x8xf32>
    %255 = vector.shape_cast %254 : vector<1x8xf32> to vector<1x8xf32>
    %256 = vector.broadcast %255 : vector<1x8xf32> to vector<8x8xf32>
    %c0_53 = arith.constant 0 : index
    %c0_54 = arith.constant 0 : index
    %257 = vector.load %arg10[%c0_53, %c0_54] : memref<8x8xf32, #tpu.memory_space<vmem>>, vector<8x8xf32>
    tpu.vector_store %arg10[%c0_53, %c0_54], %256 {strides = array<i32>} : memref<8x8xf32, #tpu.memory_space<vmem>>, vector<8x8xf32>,
    return
  }
  func.func @transform_0(%arg0: i32) -> (i32, i32) {
    %c0_i32 = arith.constant 0 : i32
    %c0_i32_0 = arith.constant 0 : i32
    return %arg0, %c0_i32 : i32, i32
  }
  func.func @transform_1(%arg0: i32) -> (i32, i32) {
    %c0_i32 = arith.constant 0 : i32
    %c0_i32_0 = arith.constant 0 : i32
    %c0_i32_1 = arith.constant 0 : i32
    return %c0_i32, %c0_i32_0 : i32, i32
  }
  func.func @transform_2(%arg0: i32) -> (i32, i32) {
    %c0_i32 = arith.constant 0 : i32
    %c0_i32_0 = arith.constant 0 : i32
    %c0_i32_1 = arith.constant 0 : i32
    return %c0_i32, %c0_i32_0 : i32, i32
  }
  func.func @transform_3(%arg0: i32) -> (i32, i32) {
    %c0_i32 = arith.constant 0 : i32
    %c0_i32_0 = arith.constant 0 : i32
    %c0_i32_1 = arith.constant 0 : i32
    return %c0_i32, %c0_i32_0 : i32, i32
  }
  func.func @transform_4(%arg0: i32) -> (i32, i32) {
    %c0_i32 = arith.constant 0 : i32
    %c0_i32_0 = arith.constant 0 : i32
    %c0_i32_1 = arith.constant 0 : i32
    return %c0_i32, %c0_i32_0 : i32, i32
  }
  func.func @transform_5(%arg0: i32) -> (i32, i32) {
    %c0_i32 = arith.constant 0 : i32
    %c0_i32_0 = arith.constant 0 : i32
    %c0_i32_1 = arith.constant 0 : i32
    return %c0_i32, %c0_i32_0 : i32, i32
  }
  func.func @transform_6(%arg0: i32) -> (i32, i32) {
    %c0_i32 = arith.constant 0 : i32
    %c0_i32_0 = arith.constant 0 : i32
    %c0_i32_1 = arith.constant 0 : i32
    return %c0_i32, %c0_i32_0 : i32, i32
  }
  func.func @transform_7(%arg0: i32) -> (i32, i32) {
    %c0_i32 = arith.constant 0 : i32
    %c0_i32_0 = arith.constant 0 : i32
    %c0_i32_1 = arith.constant 0 : i32
    return %c0_i32, %c0_i32_0 : i32, i32
  }
  func.func @transform_8(%arg0: i32) -> (i32, i32) {
    %c0_i32 = arith.constant 0 : i32
    %c0_i32_0 = arith.constant 0 : i32
    %c0_i32_1 = arith.constant 0 : i32
    return %c0_i32, %c0_i32_0 : i32, i32
  }
  func.func @transform_9(%arg0: i32) -> (i32, i32) {
    %c0_i32 = arith.constant 0 : i32
    %c0_i32_0 = arith.constant 0 : i32
    return %arg0, %c0_i32 : i32, i32
  }
}

</mosaic_0001>

<llo_original>
// kernel: independent_gru_forward.1
$region0: #{independent_gru_forward.1}
  #allocation0 [shape = 'u32[]', space=smem, size = 0x4, offset = 0x4, fixed_abs, tag = 'smem constant byte address 0x4 - core index']
  #allocation1 [shape = 'u32[72,128]{1,0:T(1,128)}', space=vmem, size = 0x9000, scoped, tag = 'internal scratch']
  %s0 = inlined_call_operand.vmem [shape: f32[64,16], index: 0, kind: input, shape index: {}]
  %s1 = inlined_call_operand.vmem [shape: f32[16,384], index: 1, kind: input, shape index: {}]
  %s2 = inlined_call_operand.vmem [shape: f32[128,384], index: 2, kind: input, shape index: {}]
  %s3 = inlined_call_operand.vmem [shape: f32[1,384], index: 3, kind: input, shape index: {}]
  %s4 = inlined_call_operand.vmem [shape: f32[8,128], index: 4, kind: input, shape index: {}]
  %s5 = inlined_call_operand.vmem [shape: f32[128,128], index: 5, kind: input, shape index: {}]
  %s6 = inlined_call_operand.vmem [shape: f32[1,128], index: 6, kind: input, shape index: {}]
  %s7 = inlined_call_operand.vmem [shape: f32[1,128], index: 7, kind: input, shape index: {}]
  %s8 = inlined_call_operand.vmem [shape: f32[1,8], index: 8, kind: input, shape index: {}]
  %s9 = inlined_call_operand.vmem [shape: f32[8,8], index: 9, kind: output, shape index: {}]
  %s10 = sld [smem:[#allocation0]]
  $region46: #{independent_gru_forward.1} parent=0
    _
  %s12 = ssub.s32 1, %s10
  %s13 = scalar_select 0, %s12, %s10
  // Predicated region
  $region2: #{independent_gru_forward.1} parent=0 // pred_check
    _
  $region3: #{independent_gru_forward.1} parent=0 // pred_check_branch
    %15 = sbr.rel (0) target = $region5
  $region4: #{independent_gru_forward.1} parent=0 // pred_region
    _
  $region5: #{independent_gru_forward.1} parent=0 // pred_fallthru
    _
  // Predicated region
  $region6: #{independent_gru_forward.1} parent=0 // pred_check
    _
  $region7: #{independent_gru_forward.1} parent=0 // pred_check_branch
    %17 = sbr.rel (0) target = $region9
  $region8: #{independent_gru_forward.1} parent=0 // pred_region
    _
  $region9: #{independent_gru_forward.1} parent=0 // pred_fallthru
    _
  // Predicated region
  $region10: #{independent_gru_forward.1} parent=0 // pred_check
    _
  $region11: #{independent_gru_forward.1} parent=0 // pred_check_branch
    %19 = sbr.rel (0) target = $region13
  $region12: #{independent_gru_forward.1} parent=0 // pred_region
    _
  $region13: #{independent_gru_forward.1} parent=0 // pred_fallthru
    _
  // Predicated region
  $region14: #{independent_gru_forward.1} parent=0 // pred_check
    _
  $region15: #{independent_gru_forward.1} parent=0 // pred_check_branch
    %21 = sbr.rel (0) target = $region17
  $region16: #{independent_gru_forward.1} parent=0 // pred_region
    _
  $region17: #{independent_gru_forward.1} parent=0 // pred_fallthru
    _
  // Predicated region
  $region18: #{independent_gru_forward.1} parent=0 // pred_check
    _
  $region19: #{independent_gru_forward.1} parent=0 // pred_check_branch
    %23 = sbr.rel (0) target = $region21
  $region20: #{independent_gru_forward.1} parent=0 // pred_region
    _
  $region21: #{independent_gru_forward.1} parent=0 // pred_fallthru
    _
  // Predicated region
  $region22: #{independent_gru_forward.1} parent=0 // pred_check
    _
  $region23: #{independent_gru_forward.1} parent=0 // pred_check_branch
    %25 = sbr.rel (0) target = $region25
  $region24: #{independent_gru_forward.1} parent=0 // pred_region
    _
  $region25: #{independent_gru_forward.1} parent=0 // pred_fallthru
    _
  // Predicated region
  $region26: #{independent_gru_forward.1} parent=0 // pred_check
    _
  $region27: #{independent_gru_forward.1} parent=0 // pred_check_branch
    %27 = sbr.rel (0) target = $region29
  $region28: #{independent_gru_forward.1} parent=0 // pred_region
    _
  $region29: #{independent_gru_forward.1} parent=0 // pred_fallthru
    _
  // Predicated region
  $region30: #{independent_gru_forward.1} parent=0 // pred_check
    _
  $region31: #{independent_gru_forward.1} parent=0 // pred_check_branch
    %29 = sbr.rel (0) target = $region33
  $region32: #{independent_gru_forward.1} parent=0 // pred_region
    _
  $region33: #{independent_gru_forward.1} parent=0 // pred_fallthru
    _
  // Predicated region
  $region34: #{independent_gru_forward.1} parent=0 // pred_check
    _
  $region35: #{independent_gru_forward.1} parent=0 // pred_check_branch
    %31 = sbr.rel (0) target = $region37
  $region36: #{independent_gru_forward.1} parent=0 // pred_region
    _
  $region37: #{independent_gru_forward.1} parent=0 // pred_fallthru
    _
  %v32 = vld [vmem:[%s1] sm:$0xff]
  %v33 = vld [vmem:[%s1 + $0x8] sm:$0xff]
  %v34 = vld [vmem:[%s1 + $0x10] sm:$0xff]
  %v35 = vld [vmem:[%s1 + $0x18] sm:$0xff]
  %v36 = vld [vmem:[%s1 + $0x20] sm:$0xff]
  %v37 = vld [vmem:[%s1 + $0x28] sm:$0xff]
  %v38 = vld [vmem:[%s2] sm:$0xff]
  %v39 = vld [vmem:[%s2 + $0x8] sm:$0xff]
  %v40 = vld [vmem:[%s2 + $0x10] sm:$0xff]
  %v41 = vld [vmem:[%s2 + $0x18] sm:$0xff]
  %v42 = vld [vmem:[%s2 + $0x20] sm:$0xff]
  %v43 = vld [vmem:[%s2 + $0x28] sm:$0xff]
  %v44 = vld [vmem:[%s2 + $0x30] sm:$0xff]
  %v45 = vld [vmem:[%s2 + $0x38] sm:$0xff]
  %v46 = vld [vmem:[%s2 + $0x40] sm:$0xff]
  %v47 = vld [vmem:[%s2 + $0x48] sm:$0xff]
  %v48 = vld [vmem:[%s2 + $0x50] sm:$0xff]
  %v49 = vld [vmem:[%s2 + $0x58] sm:$0xff]
  %v50 = vld [vmem:[%s2 + $0x60] sm:$0xff]
  %v51 = vld [vmem:[%s2 + $0x68] sm:$0xff]
  %v52 = vld [vmem:[%s2 + $0x70] sm:$0xff]
  %v53 = vld [vmem:[%s2 + $0x78] sm:$0xff]
  %v54 = vld [vmem:[%s2 + $0x80] sm:$0xff]
  %v55 = vld [vmem:[%s2 + $0x88] sm:$0xff]
  %v56 = vld [vmem:[%s2 + $0x90] sm:$0xff]
  %v57 = vld [vmem:[%s2 + $0x98] sm:$0xff]
  %v58 = vld [vmem:[%s2 + $0xa0] sm:$0xff]
  %v59 = vld [vmem:[%s2 + $0xa8] sm:$0xff]
  %v60 = vld [vmem:[%s2 + $0xb0] sm:$0xff]
  %v61 = vld [vmem:[%s2 + $0xb8] sm:$0xff]
  %v62 = vld [vmem:[%s2 + $0xc0] sm:$0xff]
  %v63 = vld [vmem:[%s2 + $0xc8] sm:$0xff]
  %v64 = vld [vmem:[%s2 + $0xd0] sm:$0xff]
  %v65 = vld [vmem:[%s2 + $0xd8] sm:$0xff]
  %v66 = vld [vmem:[%s2 + $0xe0] sm:$0xff]
  %v67 = vld [vmem:[%s2 + $0xe8] sm:$0xff]
  %v68 = vld [vmem:[%s2 + $0xf0] sm:$0xff]
  %v69 = vld [vmem:[%s2 + $0xf8] sm:$0xff]
  %v70 = vld [vmem:[%s2 + $0x100] sm:$0xff]
  %v71 = vld [vmem:[%s2 + $0x108] sm:$0xff]
  %v72 = vld [vmem:[%s2 + $0x110] sm:$0xff]
  %v73 = vld [vmem:[%s2 + $0x118] sm:$0xff]
  %v74 = vld [vmem:[%s2 + $0x120] sm:$0xff]
  %v75 = vld [vmem:[%s2 + $0x128] sm:$0xff]
  %v76 = vld [vmem:[%s2 + $0x130] sm:$0xff]
  %v77 = vld [vmem:[%s2 + $0x138] sm:$0xff]
  %v78 = vld [vmem:[%s2 + $0x140] sm:$0xff]
  %v79 = vld [vmem:[%s2 + $0x148] sm:$0xff]
  %v80 = vld [vmem:[%s2 + $0x150] sm:$0xff]
  %v81 = vld [vmem:[%s2 + $0x158] sm:$0xff]
  %v82 = vld [vmem:[%s2 + $0x160] sm:$0xff]
  %v83 = vld [vmem:[%s2 + $0x168] sm:$0xff]
  %v84 = vld [vmem:[%s2 + $0x170] sm:$0xff]
  %v85 = vld [vmem:[%s2 + $0x178] sm:$0xff]
  %v86 = vld [vmem:[%s3] sm:$0x7]
  %v87 = vld [vmem:[%s4] sm:$0xff]
  %v88 = vld [vmem:[%s0] sm:$0xff]
  %v89 = vld [vmem:[%s0 + $0x8] sm:$0xff]
  %v90 = vld [vmem:[%s0 + $0x10] sm:$0xff]
  %v91 = vld [vmem:[%s0 + $0x18] sm:$0xff]
  %v92 = vld [vmem:[%s0 + $0x20] sm:$0xff]
  %v93 = vld [vmem:[%s0 + $0x28] sm:$0xff]
  %v94 = vld [vmem:[%s0 + $0x30] sm:$0xff]
  %v95 = vld [vmem:[%s0 + $0x38] sm:$0xff]
  %v97 = vperm.slane %v86, 0
  %v98 = vperm.slane %v86, 1
  %v99 = vperm.slane %v86, 2
  %vm103 = vcmask 130048
  %v105 = vsel %vm103, %v88, 0
  %v108 = vsel %vm103, %v89, 0
  %v111 = vsel %vm103, %v90, 0
  %v114 = vsel %vm103, %v91, 0
  %v117 = vsel %vm103, %v92, 0
  %v120 = vsel %vm103, %v93, 0
  %v123 = vsel %vm103, %v94, 0
  %v126 = vsel %vm103, %v95, 0
  %128 = vmatpush.msra.mxu0 0.0
  %129 = vmatpush.msra.mxu0 0.0
  %130 = vmatpush.msra.mxu0 0.0
  %131 = vmatpush.msra.mxu0 0.0
  %132 = vmatpush.msra.mxu0 0.0
  %133 = vmatpush.msra.mxu0 0.0
  %134 = vmatpush.msra.mxu0 0.0
  %135 = vmatpush.msra.mxu0 0.0
  %136 = vmatpush.msra.mxu0 0.0
  %137 = vmatpush.msra.mxu0 0.0
  %138 = vmatpush.msra.mxu0 0.0
  %139 = vmatpush.msra.mxu0 0.0
  %140 = vmatpush.msra.mxu0 0.0
  %141 = vmatpush.msra.mxu0 0.0
  %142 = vmatpush.msra.mxu0 %v35
  %143 = vmatpush.msra.mxu0 %v32
  %144 = vmatmul.f32.gmra.mxu0 %v105
  %v145 = vpop.f32.mrf.mxu0
  %v146 = vadd.f32 %v97, %v145
  %147 = vmatmul.f32.gmra.mxu0 %v108
  %v148 = vpop.f32.mrf.mxu0
  %v149 = vadd.f32 %v97, %v148
  %150 = vmatmul.f32.gmra.mxu0 %v111
  %v151 = vpop.f32.mrf.mxu0
  %v152 = vadd.f32 %v97, %v151
  %153 = vmatmul.f32.gmra.mxu0 %v114
  %v154 = vpop.f32.mrf.mxu0
  %v155 = vadd.f32 %v97, %v154
  %156 = vmatmul.f32.gmra.mxu0 %v117
  %v157 = vpop.f32.mrf.mxu0
  %v158 = vadd.f32 %v97, %v157
  %159 = vmatmul.f32.gmra.mxu0 %v120
  %v160 = vpop.f32.mrf.mxu0
  %v161 = vadd.f32 %v97, %v160
  %162 = vmatmul.f32.gmra.mxu0 %v123
  %v163 = vpop.f32.mrf.mxu0
  %v164 = vadd.f32 %v97, %v163
  %165 = vmatmul.f32.gmra.mxu0 %v126
  %v166 = vpop.f32.mrf.mxu0
  %v167 = vadd.f32 %v97, %v166
  %168 = vdwg.mxu0
  %169 = vmatpush.msra.mxu0 0.0
  %170 = vmatpush.msra.mxu0 0.0
  %171 = vmatpush.msra.mxu0 0.0
  %172 = vmatpush.msra.mxu0 0.0
  %173 = vmatpush.msra.mxu0 0.0
  %174 = vmatpush.msra.mxu0 0.0
  %175 = vmatpush.msra.mxu0 0.0
  %176 = vmatpush.msra.mxu0 0.0
  %177 = vmatpush.msra.mxu0 0.0
  %178 = vmatpush.msra.mxu0 0.0
  %179 = vmatpush.msra.mxu0 0.0
  %180 = vmatpush.msra.mxu0 0.0
  %181 = vmatpush.msra.mxu0 0.0
  %182 = vmatpush.msra.mxu0 0.0
  %183 = vmatpush.msra.mxu0 %v36
  %184 = vmatpush.msra.mxu0 %v33
  %185 = vmatmul.f32.gmra.mxu0 %v105
  %v186 = vpop.f32.mrf.mxu0
  %v187 = vadd.f32 %v98, %v186
  %188 = vmatmul.f32.gmra.mxu0 %v108
  %v189 = vpop.f32.mrf.mxu0
  %v190 = vadd.f32 %v98, %v189
  %191 = vmatmul.f32.gmra.mxu0 %v111
  %v192 = vpop.f32.mrf.mxu0
  %v193 = vadd.f32 %v98, %v192
  %194 = vmatmul.f32.gmra.mxu0 %v114
  %v195 = vpop.f32.mrf.mxu0
  %v196 = vadd.f32 %v98, %v195
  %197 = vmatmul.f32.gmra.mxu0 %v117
  %v198 = vpop.f32.mrf.mxu0
  %v199 = vadd.f32 %v98, %v198
  %200 = vmatmul.f32.gmra.mxu0 %v120
  %v201 = vpop.f32.mrf.mxu0
  %v202 = vadd.f32 %v98, %v201
  %203 = vmatmul.f32.gmra.mxu0 %v123
  %v204 = vpop.f32.mrf.mxu0
  %v205 = vadd.f32 %v98, %v204
  %206 = vmatmul.f32.gmra.mxu0 %v126
  %v207 = vpop.f32.mrf.mxu0
  %v208 = vadd.f32 %v98, %v207
  %209 = vdwg.mxu0
  %210 = vmatpush.msra.mxu0 0.0
  %211 = vmatpush.msra.mxu0 0.0
  %212 = vmatpush.msra.mxu0 0.0
  %213 = vmatpush.msra.mxu0 0.0
  %214 = vmatpush.msra.mxu0 0.0
  %215 = vmatpush.msra.mxu0 0.0
  %216 = vmatpush.msra.mxu0 0.0
  %217 = vmatpush.msra.mxu0 0.0
  %218 = vmatpush.msra.mxu0 0.0
  %219 = vmatpush.msra.mxu0 0.0
  %220 = vmatpush.msra.mxu0 0.0
  %221 = vmatpush.msra.mxu0 0.0
  %222 = vmatpush.msra.mxu0 0.0
  %223 = vmatpush.msra.mxu0 0.0
  %224 = vmatpush.msra.mxu0 %v37
  %225 = vmatpush.msra.mxu0 %v34
  %226 = vmatmul.f32.gmra.mxu0 %v105
  %v227 = vpop.f32.mrf.mxu0
  %v228 = vadd.f32 %v99, %v227
  %229 = vmatmul.f32.gmra.mxu0 %v108
  %v230 = vpop.f32.mrf.mxu0
  %v231 = vadd.f32 %v99, %v230
  %232 = vmatmul.f32.gmra.mxu0 %v111
  %v233 = vpop.f32.mrf.mxu0
  %v234 = vadd.f32 %v99, %v233
  %235 = vmatmul.f32.gmra.mxu0 %v114
  %v236 = vpop.f32.mrf.mxu0
  %v237 = vadd.f32 %v99, %v236
  %238 = vmatmul.f32.gmra.mxu0 %v117
  %v239 = vpop.f32.mrf.mxu0
  %v240 = vadd.f32 %v99, %v239
  %241 = vmatmul.f32.gmra.mxu0 %v120
  %v242 = vpop.f32.mrf.mxu0
  %v243 = vadd.f32 %v99, %v242
  %244 = vmatmul.f32.gmra.mxu0 %v123
  %v245 = vpop.f32.mrf.mxu0
  %v246 = vadd.f32 %v99, %v245
  %247 = vmatmul.f32.gmra.mxu0 %v126
  %v248 = vpop.f32.mrf.mxu0
  %v249 = vadd.f32 %v99, %v248
  %250 = vdwg.mxu0
  %251 = vmatpush.msra.mxu0 %v83
  %252 = vmatpush.msra.mxu0 %v80
  %253 = vmatpush.msra.mxu0 %v77
  %254 = vmatpush.msra.mxu0 %v74
  %255 = vmatpush.msra.mxu0 %v71
  %256 = vmatpush.msra.mxu0 %v68
  %257 = vmatpush.msra.mxu0 %v65
  %258 = vmatpush.msra.mxu0 %v62
  %259 = vmatpush.msra.mxu0 %v59
  %260 = vmatpush.msra.mxu0 %v56
  %261 = vmatpush.msra.mxu0 %v53
  %262 = vmatpush.msra.mxu0 %v50
  %263 = vmatpush.msra.mxu0 %v47
  %264 = vmatpush.msra.mxu0 %v44
  %265 = vmatpush.msra.mxu0 %v41
  %266 = vmatpush.msra.mxu0 %v38
  %267 = vmatmul.f32.gmra.mxu0 0.0
  %v268 = vpop.f32.mrf.mxu0
  %v269 = vadd.f32 0.0, %v268
  %270 = vdwg.mxu0
  %271 = vmatpush.msra.mxu0 %v84
  %272 = vmatpush.msra.mxu0 %v81
  %273 = vmatpush.msra.mxu0 %v78
  %274 = vmatpush.msra.mxu0 %v75
  %275 = vmatpush.msra.mxu0 %v72
  %276 = vmatpush.msra.mxu0 %v69
  %277 = vmatpush.msra.mxu0 %v66
  %278 = vmatpush.msra.mxu0 %v63
  %279 = vmatpush.msra.mxu0 %v60
  %280 = vmatpush.msra.mxu0 %v57
  %281 = vmatpush.msra.mxu0 %v54
  %282 = vmatpush.msra.mxu0 %v51
  %283 = vmatpush.msra.mxu0 %v48
  %284 = vmatpush.msra.mxu0 %v45
  %285 = vmatpush.msra.mxu0 %v42
  %286 = vmatpush.msra.mxu0 %v39
  %287 = vmatmul.f32.gmra.mxu0 0.0
  %v288 = vpop.f32.mrf.mxu0
  %v289 = vadd.f32 0.0, %v288
  %290 = vdwg.mxu0
  %291 = vmatpush.msra.mxu0 %v85
  %292 = vmatpush.msra.mxu0 %v82
  %293 = vmatpush.msra.mxu0 %v79
  %294 = vmatpush.msra.mxu0 %v76
  %295 = vmatpush.msra.mxu0 %v73
  %296 = vmatpush.msra.mxu0 %v70
  %297 = vmatpush.msra.mxu0 %v67
  %298 = vmatpush.msra.mxu0 %v64
  %299 = vmatpush.msra.mxu0 %v61
  %300 = vmatpush.msra.mxu0 %v58
  %301 = vmatpush.msra.mxu0 %v55
  %302 = vmatpush.msra.mxu0 %v52
  %303 = vmatpush.msra.mxu0 %v49
  %304 = vmatpush.msra.mxu0 %v46
  %305 = vmatpush.msra.mxu0 %v43
  %306 = vmatpush.msra.mxu0 %v40
  %307 = vmatmul.f32.gmra.mxu0 0.0
  %v308 = vpop.f32.mrf.mxu0
  %v309 = vadd.f32 0.0, %v308
  %310 = vdwg.mxu0
  %v311 = vadd.f32 %v146, %v269
  %v312 = vxor.u32 %v311, 2147483648
  %v313 = vmul.f32 %v312, 1.442695
  %v314 = vpow.pop %v313
  %v315 = vadd.f32 %v314, 1.0
  %v316 = vrcp.pop %v315
  %v317 = vmul.f32 %v315, %v316
  %v318 = vsub.f32 1.0, %v317
  %v319 = vmul.f32 %v316, %v318
  %v320 = vadd.f32 %v316, %v319
  %vm321 = vweird.f32 %v315
  %vm322 = vweird.f32 %v316
  %vm323 = vmor %vm321, %vm322
  %v324 = vsel %vm323, %v316, %v320
  %v325 = vand.u32 2147483647, %v315
  %vm326 = vcmp.eq.f32.partialorder %v325, 8.507059e+37
  %v327 = vand.u32 %v315, 2147483648
  %v328 = vor.u32 1.1754944e-38, %v327
  %v329 = vsel %vm326, %v328, %v324
  %v330 = vmul.f32 1.0, %v329
  %v331 = vadd.f32 %v187, %v289
  %v332 = vxor.u32 %v331, 2147483648
  %v333 = vmul.f32 %v332, 1.442695
  %v334 = vpow.pop %v333
  %v335 = vadd.f32 %v334, 1.0
  %v336 = vrcp.pop %v335
  %v337 = vmul.f32 %v335, %v336
  %v338 = vsub.f32 1.0, %v337
  %v339 = vmul.f32 %v336, %v338
  %v340 = vadd.f32 %v336, %v339
  %vm341 = vweird.f32 %v335
  %vm342 = vweird.f32 %v336
  %vm343 = vmor %vm341, %vm342
  %v344 = vsel %vm343, %v336, %v340
  %v345 = vand.u32 2147483647, %v335
  %vm346 = vcmp.eq.f32.partialorder %v345, 8.507059e+37
  %v347 = vand.u32 %v335, 2147483648
  %v348 = vor.u32 1.1754944e-38, %v347
  %v349 = vsel %vm346, %v348, %v344
  %v350 = vmul.f32 1.0, %v349
  %v351 = vadd.f32 %v309, %v87
  %v352 = vmul.f32 %v330, %v351
  %v353 = vadd.f32 %v228, %v352
  %v354 = vtanh.pop %v353
  %v355 = vsub.f32 1.0, %v350
  %v356 = vmul.f32 %v355, %v354
  %v357 = vmul.f32 %v350, 0.0
  %v358 = vadd.f32 %v356, %v357
  %359 = vmatpush.msra.mxu0 %v83
  %360 = vmatpush.msra.mxu0 %v80
  %361 = vmatpush.msra.mxu0 %v77
  %362 = vmatpush.msra.mxu0 %v74
  %363 = vmatpush.msra.mxu0 %v71
  %364 = vmatpush.msra.mxu0 %v68
  %365 = vmatpush.msra.mxu0 %v65
  %366 = vmatpush.msra.mxu0 %v62
  %367 = vmatpush.msra.mxu0 %v59
  %368 = vmatpush.msra.mxu0 %v56
  %369 = vmatpush.msra.mxu0 %v53
  %370 = vmatpush.msra.mxu0 %v50
  %371 = vmatpush.msra.mxu0 %v47
  %372 = vmatpush.msra.mxu0 %v44
  %373 = vmatpush.msra.mxu0 %v41
  %374 = vmatpush.msra.mxu0 %v38
  %375 = vmatmul.f32.gmra.mxu0 %v358
  %v376 = vpop.f32.mrf.mxu0
  %v377 = vadd.f32 0.0, %v376
  %378 = vdwg.mxu0
  %379 = vmatpush.msra.mxu0 %v84
  %380 = vmatpush.msra.mxu0 %v81
  %381 = vmatpush.msra.mxu0 %v78
  %382 = vmatpush.msra.mxu0 %v75
  %383 = vmatpush.msra.mxu0 %v72
  %384 = vmatpush.msra.mxu0 %v69
  %385 = vmatpush.msra.mxu0 %v66
  %386 = vmatpush.msra.mxu0 %v63
  %387 = vmatpush.msra.mxu0 %v60
  %388 = vmatpush.msra.mxu0 %v57
  %389 = vmatpush.msra.mxu0 %v54
  %390 = vmatpush.msra.mxu0 %v51
  %391 = vmatpush.msra.mxu0 %v48
  %392 = vmatpush.msra.mxu0 %v45
  %393 = vmatpush.msra.mxu0 %v42
  %394 = vmatpush.msra.mxu0 %v39
  %395 = vmatmul.f32.gmra.mxu0 %v358
  %v396 = vpop.f32.mrf.mxu0
  %v397 = vadd.f32 0.0, %v396
  %398 = vdwg.mxu0
  %399 = vmatpush.msra.mxu0 %v85
  %400 = vmatpush.msra.mxu0 %v82
  %401 = vmatpush.msra.mxu0 %v79
  %402 = vmatpush.msra.mxu0 %v76
  %403 = vmatpush.msra.mxu0 %v73
  %404 = vmatpush.msra.mxu0 %v70
  %405 = vmatpush.msra.mxu0 %v67
  %406 = vmatpush.msra.mxu0 %v64
  %407 = vmatpush.msra.mxu0 %v61
  %408 = vmatpush.msra.mxu0 %v58
  %409 = vmatpush.msra.mxu0 %v55
  %410 = vmatpush.msra.mxu0 %v52
  %411 = vmatpush.msra.mxu0 %v49
  %412 = vmatpush.msra.mxu0 %v46
  %413 = vmatpush.msra.mxu0 %v43
  %414 = vmatpush.msra.mxu0 %v40
  %415 = vmatmul.f32.gmra.mxu0 %v358
  %v416 = vpop.f32.mrf.mxu0
  %v417 = vadd.f32 0.0, %v416
  %418 = vdwg.mxu0
  %v419 = vadd.f32 %v149, %v377
  %v420 = vxor.u32 %v419, 2147483648
  %v421 = vmul.f32 %v420, 1.442695
  %v422 = vpow.pop %v421
  %v423 = vadd.f32 %v422, 1.0
  %v424 = vrcp.pop %v423
  %v425 = vmul.f32 %v423, %v424
  %v426 = vsub.f32 1.0, %v425
  %v427 = vmul.f32 %v424, %v426
  %v428 = vadd.f32 %v424, %v427
  %vm429 = vweird.f32 %v423
  %vm430 = vweird.f32 %v424
  %vm431 = vmor %vm429, %vm430
  %v432 = vsel %vm431, %v424, %v428
  %v433 = vand.u32 2147483647, %v423
  %vm434 = vcmp.eq.f32.partialorder %v433, 8.507059e+37
  %v435 = vand.u32 %v423, 2147483648
  %v436 = vor.u32 1.1754944e-38, %v435
  %v437 = vsel %vm434, %v436, %v432
  %v438 = vmul.f32 1.0, %v437
  %v439 = vadd.f32 %v190, %v397
  %v440 = vxor.u32 %v439, 2147483648
  %v441 = vmul.f32 %v440, 1.442695
  %v442 = vpow.pop %v441
  %v443 = vadd.f32 %v442, 1.0
  %v444 = vrcp.pop %v443
  %v445 = vmul.f32 %v443, %v444
  %v446 = vsub.f32 1.0, %v445
  %v447 = vmul.f32 %v444, %v446
  %v448 = vadd.f32 %v444, %v447
  %vm449 = vweird.f32 %v443
  %vm450 = vweird.f32 %v444
  %vm451 = vmor %vm449, %vm450
  %v452 = vsel %vm451, %v444, %v448
  %v453 = vand.u32 2147483647, %v443
  %vm454 = vcmp.eq.f32.partialorder %v453, 8.507059e+37
  %v455 = vand.u32 %v443, 2147483648
  %v456 = vor.u32 1.1754944e-38, %v455
  %v457 = vsel %vm454, %v456, %v452
  %v458 = vmul.f32 1.0, %v457
  %v459 = vadd.f32 %v417, %v87
  %v460 = vmul.f32 %v438, %v459
  %v461 = vadd.f32 %v231, %v460
  %v462 = vtanh.pop %v461
  %v463 = vsub.f32 1.0, %v458
  %v464 = vmul.f32 %v463, %v462
  %v465 = vmul.f32 %v458, %v358
  %v466 = vadd.f32 %v464, %v465
  %467 = vmatpush.msra.mxu0 %v83
  %468 = vmatpush.msra.mxu0 %v80
  %469 = vmatpush.msra.mxu0 %v77
  %470 = vmatpush.msra.mxu0 %v74
  %471 = vmatpush.msra.mxu0 %v71
  %472 = vmatpush.msra.mxu0 %v68
  %473 = vmatpush.msra.mxu0 %v65
  %474 = vmatpush.msra.mxu0 %v62
  %475 = vmatpush.msra.mxu0 %v59
  %476 = vmatpush.msra.mxu0 %v56
  %477 = vmatpush.msra.mxu0 %v53
  %478 = vmatpush.msra.mxu0 %v50
  %479 = vmatpush.msra.mxu0 %v47
  %480 = vmatpush.msra.mxu0 %v44
  %481 = vmatpush.msra.mxu0 %v41
  %482 = vmatpush.msra.mxu0 %v38
  %483 = vmatmul.f32.gmra.mxu0 %v466
  %v484 = vpop.f32.mrf.mxu0
  %v485 = vadd.f32 0.0, %v484
  %486 = vdwg.mxu0
  %487 = vmatpush.msra.mxu0 %v84
  %488 = vmatpush.msra.mxu0 %v81
  %489 = vmatpush.msra.mxu0 %v78
  %490 = vmatpush.msra.mxu0 %v75
  %491 = vmatpush.msra.mxu0 %v72
  %492 = vmatpush.msra.mxu0 %v69
  %493 = vmatpush.msra.mxu0 %v66
  %494 = vmatpush.msra.mxu0 %v63
  %495 = vmatpush.msra.mxu0 %v60
  %496 = vmatpush.msra.mxu0 %v57
  %497 = vmatpush.msra.mxu0 %v54
  %498 = vmatpush.msra.mxu0 %v51
  %499 = vmatpush.msra.mxu0 %v48
  %500 = vmatpush.msra.mxu0 %v45
  %501 = vmatpush.msra.mxu0 %v42
  %502 = vmatpush.msra.mxu0 %v39
  %503 = vmatmul.f32.gmra.mxu0 %v466
  %v504 = vpop.f32.mrf.mxu0
  %v505 = vadd.f32 0.0, %v504
  %506 = vdwg.mxu0
  %507 = vmatpush.msra.mxu0 %v85
  %508 = vmatpush.msra.mxu0 %v82
  %509 = vmatpush.msra.mxu0 %v79
  %510 = vmatpush.msra.mxu0 %v76
  %511 = vmatpush.msra.mxu0 %v73
  %512 = vmatpush.msra.mxu0 %v70
  %513 = vmatpush.msra.mxu0 %v67
  %514 = vmatpush.msra.mxu0 %v64
  %515 = vmatpush.msra.mxu0 %v61
  %516 = vmatpush.msra.mxu0 %v58
  %517 = vmatpush.msra.mxu0 %v55
  %518 = vmatpush.msra.mxu0 %v52
  %519 = vmatpush.msra.mxu0 %v49
  %520 = vmatpush.msra.mxu0 %v46
  %521 = vmatpush.msra.mxu0 %v43
  %522 = vmatpush.msra.mxu0 %v40
  %523 = vmatmul.f32.gmra.mxu0 %v466
  %v524 = vpop.f32.mrf.mxu0
  %v525 = vadd.f32 0.0, %v524
  %526 = vdwg.mxu0
  %v527 = vadd.f32 %v152, %v485
  %v528 = vxor.u32 %v527, 2147483648
  %v529 = vmul.f32 %v528, 1.442695
  %v530 = vpow.pop %v529
  %v531 = vadd.f32 %v530, 1.0
  %v532 = vrcp.pop %v531
  %v533 = vmul.f32 %v531, %v532
  %v534 = vsub.f32 1.0, %v533
  %v535 = vmul.f32 %v532, %v534
  %v536 = vadd.f32 %v532, %v535
  %vm537 = vweird.f32 %v531
  %vm538 = vweird.f32 %v532
  %vm539 = vmor %vm537, %vm538
  %v540 = vsel %vm539, %v532, %v536
  %v541 = vand.u32 2147483647, %v531
  %vm542 = vcmp.eq.f32.partialorder %v541, 8.507059e+37
  %v543 = vand.u32 %v531, 2147483648
  %v544 = vor.u32 1.1754944e-38, %v543
  %v545 = vsel %vm542, %v544, %v540
  %v546 = vmul.f32 1.0, %v545
  %v547 = vadd.f32 %v193, %v505
  %v548 = vxor.u32 %v547, 2147483648
  %v549 = vmul.f32 %v548, 1.442695
  %v550 = vpow.pop %v549
  %v551 = vadd.f32 %v550, 1.0
  %v552 = vrcp.pop %v551
  %v553 = vmul.f32 %v551, %v552
  %v554 = vsub.f32 1.0, %v553
  %v555 = vmul.f32 %v552, %v554
  %v556 = vadd.f32 %v552, %v555
  %vm557 = vweird.f32 %v551
  %vm558 = vweird.f32 %v552
  %vm559 = vmor %vm557, %vm558
  %v560 = vsel %vm559, %v552, %v556
  %v561 = vand.u32 2147483647, %v551
  %vm562 = vcmp.eq.f32.partialorder %v561, 8.507059e+37
  %v563 = vand.u32 %v551, 2147483648
  %v564 = vor.u32 1.1754944e-38, %v563
  %v565 = vsel %vm562, %v564, %v560
  %v566 = vmul.f32 1.0, %v565
  %v567 = vadd.f32 %v525, %v87
  %v568 = vmul.f32 %v546, %v567
  %v569 = vadd.f32 %v234, %v568
  %v570 = vtanh.pop %v569
  %v571 = vsub.f32 1.0, %v566
  %v572 = vmul.f32 %v571, %v570
  %v573 = vmul.f32 %v566, %v466
  %v574 = vadd.f32 %v572, %v573
  %575 = vmatpush.msra.mxu0 %v83
  %576 = vmatpush.msra.mxu0 %v80
  %577 = vmatpush.msra.mxu0 %v77
  %578 = vmatpush.msra.mxu0 %v74
  %579 = vmatpush.msra.mxu0 %v71
  %580 = vmatpush.msra.mxu0 %v68
  %581 = vmatpush.msra.mxu0 %v65
  %582 = vmatpush.msra.mxu0 %v62
  %583 = vmatpush.msra.mxu0 %v59
  %584 = vmatpush.msra.mxu0 %v56
  %585 = vmatpush.msra.mxu0 %v53
  %586 = vmatpush.msra.mxu0 %v50
  %587 = vmatpush.msra.mxu0 %v47
  %588 = vmatpush.msra.mxu0 %v44
  %589 = vmatpush.msra.mxu0 %v41
  %590 = vmatpush.msra.mxu0 %v38
  %591 = vmatmul.f32.gmra.mxu0 %v574
  %v592 = vpop.f32.mrf.mxu0
  %v593 = vadd.f32 0.0, %v592
  %594 = vdwg.mxu0
  %595 = vmatpush.msra.mxu0 %v84
  %596 = vmatpush.msra.mxu0 %v81
  %597 = vmatpush.msra.mxu0 %v78
  %598 = vmatpush.msra.mxu0 %v75
  %599 = vmatpush.msra.mxu0 %v72
  %600 = vmatpush.msra.mxu0 %v69
  %601 = vmatpush.msra.mxu0 %v66
  %602 = vmatpush.msra.mxu0 %v63
  %603 = vmatpush.msra.mxu0 %v60
  %604 = vmatpush.msra.mxu0 %v57
  %605 = vmatpush.msra.mxu0 %v54
  %606 = vmatpush.msra.mxu0 %v51
  %607 = vmatpush.msra.mxu0 %v48
  %608 = vmatpush.msra.mxu0 %v45
  %609 = vmatpush.msra.mxu0 %v42
  %610 = vmatpush.msra.mxu0 %v39
  %611 = vmatmul.f32.gmra.mxu0 %v574
  %v612 = vpop.f32.mrf.mxu0
  %v613 = vadd.f32 0.0, %v612
  %614 = vdwg.mxu0
  %615 = vmatpush.msra.mxu0 %v85
  %616 = vmatpush.msra.mxu0 %v82
  %617 = vmatpush.msra.mxu0 %v79
  %618 = vmatpush.msra.mxu0 %v76
  %619 = vmatpush.msra.mxu0 %v73
  %620 = vmatpush.msra.mxu0 %v70
  %621 = vmatpush.msra.mxu0 %v67
  %622 = vmatpush.msra.mxu0 %v64
  %623 = vmatpush.msra.mxu0 %v61
  %624 = vmatpush.msra.mxu0 %v58
  %625 = vmatpush.msra.mxu0 %v55
  %626 = vmatpush.msra.mxu0 %v52
  %627 = vmatpush.msra.mxu0 %v49
  %628 = vmatpush.msra.mxu0 %v46
  %629 = vmatpush.msra.mxu0 %v43
  %630 = vmatpush.msra.mxu0 %v40
  %631 = vmatmul.f32.gmra.mxu0 %v574
  %v632 = vpop.f32.mrf.mxu0
  %v633 = vadd.f32 0.0, %v632
  %634 = vdwg.mxu0
  %v635 = vadd.f32 %v155, %v593
  %v636 = vxor.u32 %v635, 2147483648
  %v637 = vmul.f32 %v636, 1.442695
  %v638 = vpow.pop %v637
  %v639 = vadd.f32 %v638, 1.0
  %v640 = vrcp.pop %v639
  %v641 = vmul.f32 %v639, %v640
  %v642 = vsub.f32 1.0, %v641
  %v643 = vmul.f32 %v640, %v642
  %v644 = vadd.f32 %v640, %v643
  %vm645 = vweird.f32 %v639
  %vm646 = vweird.f32 %v640
  %vm647 = vmor %vm645, %vm646
  %v648 = vsel %vm647, %v640, %v644
  %v649 = vand.u32 2147483647, %v639
  %vm650 = vcmp.eq.f32.partialorder %v649, 8.507059e+37
  %v651 = vand.u32 %v639, 2147483648
  %v652 = vor.u32 1.1754944e-38, %v651
  %v653 = vsel %vm650, %v652, %v648
  %v654 = vmul.f32 1.0, %v653
  %v655 = vadd.f32 %v196, %v613
  %v656 = vxor.u32 %v655, 2147483648
  %v657 = vmul.f32 %v656, 1.442695
  %v658 = vpow.pop %v657
  %v659 = vadd.f32 %v658, 1.0
  %v660 = vrcp.pop %v659
  %v661 = vmul.f32 %v659, %v660
  %v662 = vsub.f32 1.0, %v661
  %v663 = vmul.f32 %v660, %v662
  %v664 = vadd.f32 %v660, %v663
  %vm665 = vweird.f32 %v659
  %vm666 = vweird.f32 %v660
  %vm667 = vmor %vm665, %vm666
  %v668 = vsel %vm667, %v660, %v664
  %v669 = vand.u32 2147483647, %v659
  %vm670 = vcmp.eq.f32.partialorder %v669, 8.507059e+37
  %v671 = vand.u32 %v659, 2147483648
  %v672 = vor.u32 1.1754944e-38, %v671
  %v673 = vsel %vm670, %v672, %v668
  %v674 = vmul.f32 1.0, %v673
  %v675 = vadd.f32 %v633, %v87
  %v676 = vmul.f32 %v654, %v675
  %v677 = vadd.f32 %v237, %v676
  %v678 = vtanh.pop %v677
  %v679 = vsub.f32 1.0, %v674
  %v680 = vmul.f32 %v679, %v678
  %v681 = vmul.f32 %v674, %v574
  %v682 = vadd.f32 %v680, %v681
  %683 = vmatpush.msra.mxu0 %v83
  %684 = vmatpush.msra.mxu0 %v80
  %685 = vmatpush.msra.mxu0 %v77
  %686 = vmatpush.msra.mxu0 %v74
  %687 = vmatpush.msra.mxu0 %v71
  %688 = vmatpush.msra.mxu0 %v68
  %689 = vmatpush.msra.mxu0 %v65
  %690 = vmatpush.msra.mxu0 %v62
  %691 = vmatpush.msra.mxu0 %v59
  %692 = vmatpush.msra.mxu0 %v56
  %693 = vmatpush.msra.mxu0 %v53
  %694 = vmatpush.msra.mxu0 %v50
  %695 = vmatpush.msra.mxu0 %v47
  %696 = vmatpush.msra.mxu0 %v44
  %697 = vmatpush.msra.mxu0 %v41
  %698 = vmatpush.msra.mxu0 %v38
  %699 = vmatmul.f32.gmra.mxu0 %v682
  %v700 = vpop.f32.mrf.mxu0
  %v701 = vadd.f32 0.0, %v700
  %702 = vdwg.mxu0
  %703 = vmatpush.msra.mxu0 %v84
  %704 = vmatpush.msra.mxu0 %v81
  %705 = vmatpush.msra.mxu0 %v78
  %706 = vmatpush.msra.mxu0 %v75
  %707 = vmatpush.msra.mxu0 %v72
  %708 = vmatpush.msra.mxu0 %v69
  %709 = vmatpush.msra.mxu0 %v66
  %710 = vmatpush.msra.mxu0 %v63
  %711 = vmatpush.msra.mxu0 %v60
  %712 = vmatpush.msra.mxu0 %v57
  %713 = vmatpush.msra.mxu0 %v54
  %714 = vmatpush.msra.mxu0 %v51
  %715 = vmatpush.msra.mxu0 %v48
  %716 = vmatpush.msra.mxu0 %v45
  %717 = vmatpush.msra.mxu0 %v42
  %718 = vmatpush.msra.mxu0 %v39
  %719 = vmatmul.f32.gmra.mxu0 %v682
  %v720 = vpop.f32.mrf.mxu0
  %v721 = vadd.f32 0.0, %v720
  %722 = vdwg.mxu0
  %723 = vmatpush.msra.mxu0 %v85
  %724 = vmatpush.msra.mxu0 %v82
  %725 = vmatpush.msra.mxu0 %v79
  %726 = vmatpush.msra.mxu0 %v76
  %727 = vmatpush.msra.mxu0 %v73
  %728 = vmatpush.msra.mxu0 %v70
  %729 = vmatpush.msra.mxu0 %v67
  %730 = vmatpush.msra.mxu0 %v64
  %731 = vmatpush.msra.mxu0 %v61
  %732 = vmatpush.msra.mxu0 %v58
  %733 = vmatpush.msra.mxu0 %v55
  %734 = vmatpush.msra.mxu0 %v52
  %735 = vmatpush.msra.mxu0 %v49
  %736 = vmatpush.msra.mxu0 %v46
  %737 = vmatpush.msra.mxu0 %v43
  %738 = vmatpush.msra.mxu0 %v40
  %739 = vmatmul.f32.gmra.mxu0 %v682
  %v740 = vpop.f32.mrf.mxu0
  %v741 = vadd.f32 0.0, %v740
  %742 = vdwg.mxu0
  %v743 = vadd.f32 %v158, %v701
  %v744 = vxor.u32 %v743, 2147483648
  %v745 = vmul.f32 %v744, 1.442695
  %v746 = vpow.pop %v745
  %v747 = vadd.f32 %v746, 1.0
  %v748 = vrcp.pop %v747
  %v749 = vmul.f32 %v747, %v748
  %v750 = vsub.f32 1.0, %v749
  %v751 = vmul.f32 %v748, %v750
  %v752 = vadd.f32 %v748, %v751
  %vm753 = vweird.f32 %v747
  %vm754 = vweird.f32 %v748
  %vm755 = vmor %vm753, %vm754
  %v756 = vsel %vm755, %v748, %v752
  %v757 = vand.u32 2147483647, %v747
  %vm758 = vcmp.eq.f32.partialorder %v757, 8.507059e+37
  %v759 = vand.u32 %v747, 2147483648
  %v760 = vor.u32 1.1754944e-38, %v759
  %v761 = vsel %vm758, %v760, %v756
  %v762 = vmul.f32 1.0, %v761
  %v763 = vadd.f32 %v199, %v721
  %v764 = vxor.u32 %v763, 2147483648
  %v765 = vmul.f32 %v764, 1.442695
  %v766 = vpow.pop %v765
  %v767 = vadd.f32 %v766, 1.0
  %v768 = vrcp.pop %v767
  %v769 = vmul.f32 %v767, %v768
  %v770 = vsub.f32 1.0, %v769
  %v771 = vmul.f32 %v768, %v770
  %v772 = vadd.f32 %v768, %v771
  %vm773 = vweird.f32 %v767
  %vm774 = vweird.f32 %v768
  %vm775 = vmor %vm773, %vm774
  %v776 = vsel %vm775, %v768, %v772
  %v777 = vand.u32 2147483647, %v767
  %vm778 = vcmp.eq.f32.partialorder %v777, 8.507059e+37
  %v779 = vand.u32 %v767, 2147483648
  %v780 = vor.u32 1.1754944e-38, %v779
  %v781 = vsel %vm778, %v780, %v776
  %v782 = vmul.f32 1.0, %v781
  %v783 = vadd.f32 %v741, %v87
  %v784 = vmul.f32 %v762, %v783
  %v785 = vadd.f32 %v240, %v784
  %v786 = vtanh.pop %v785
  %v787 = vsub.f32 1.0, %v782
  %v788 = vmul.f32 %v787, %v786
  %v789 = vmul.f32 %v782, %v682
  %v790 = vadd.f32 %v788, %v789
  %791 = vmatpush.msra.mxu0 %v83
  %792 = vmatpush.msra.mxu0 %v80
  %793 = vmatpush.msra.mxu0 %v77
  %794 = vmatpush.msra.mxu0 %v74
  %795 = vmatpush.msra.mxu0 %v71
  %796 = vmatpush.msra.mxu0 %v68
  %797 = vmatpush.msra.mxu0 %v65
  %798 = vmatpush.msra.mxu0 %v62
  %799 = vmatpush.msra.mxu0 %v59
  %800 = vmatpush.msra.mxu0 %v56
  %801 = vmatpush.msra.mxu0 %v53
  %802 = vmatpush.msra.mxu0 %v50
  %803 = vmatpush.msra.mxu0 %v47
  %804 = vmatpush.msra.mxu0 %v44
  %805 = vmatpush.msra.mxu0 %v41
  %806 = vmatpush.msra.mxu0 %v38
  %807 = vmatmul.f32.gmra.mxu0 %v790
  %v808 = vpop.f32.mrf.mxu0
  %v809 = vadd.f32 0.0, %v808
  %810 = vdwg.mxu0
  %811 = vmatpush.msra.mxu0 %v84
  %812 = vmatpush.msra.mxu0 %v81
  %813 = vmatpush.msra.mxu0 %v78
  %814 = vmatpush.msra.mxu0 %v75
  %815 = vmatpush.msra.mxu0 %v72
  %816 = vmatpush.msra.mxu0 %v69
  %817 = vmatpush.msra.mxu0 %v66
  %818 = vmatpush.msra.mxu0 %v63
  %819 = vmatpush.msra.mxu0 %v60
  %820 = vmatpush.msra.mxu0 %v57
  %821 = vmatpush.msra.mxu0 %v54
  %822 = vmatpush.msra.mxu0 %v51
  %823 = vmatpush.msra.mxu0 %v48
  %824 = vmatpush.msra.mxu0 %v45
  %825 = vmatpush.msra.mxu0 %v42
  %826 = vmatpush.msra.mxu0 %v39
  %827 = vmatmul.f32.gmra.mxu0 %v790
  %v828 = vpop.f32.mrf.mxu0
  %v829 = vadd.f32 0.0, %v828
  %830 = vdwg.mxu0
  %831 = vmatpush.msra.mxu0 %v85
  %832 = vmatpush.msra.mxu0 %v82
  %833 = vmatpush.msra.mxu0 %v79
  %834 = vmatpush.msra.mxu0 %v76
  %835 = vmatpush.msra.mxu0 %v73
  %836 = vmatpush.msra.mxu0 %v70
  %837 = vmatpush.msra.mxu0 %v67
  %838 = vmatpush.msra.mxu0 %v64
  %839 = vmatpush.msra.mxu0 %v61
  %840 = vmatpush.msra.mxu0 %v58
  %841 = vmatpush.msra.mxu0 %v55
  %842 = vmatpush.msra.mxu0 %v52
  %843 = vmatpush.msra.mxu0 %v49
  %844 = vmatpush.msra.mxu0 %v46
  %845 = vmatpush.msra.mxu0 %v43
  %846 = vmatpush.msra.mxu0 %v40
  %847 = vmatmul.f32.gmra.mxu0 %v790
  %v848 = vpop.f32.mrf.mxu0
  %v849 = vadd.f32 0.0, %v848
  %850 = vdwg.mxu0
  %v851 = vadd.f32 %v161, %v809
  %v852 = vxor.u32 %v851, 2147483648
  %v853 = vmul.f32 %v852, 1.442695
  %v854 = vpow.pop %v853
  %v855 = vadd.f32 %v854, 1.0
  %v856 = vrcp.pop %v855
  %v857 = vmul.f32 %v855, %v856
  %v858 = vsub.f32 1.0, %v857
  %v859 = vmul.f32 %v856, %v858
  %v860 = vadd.f32 %v856, %v859
  %vm861 = vweird.f32 %v855
  %vm862 = vweird.f32 %v856
  %vm863 = vmor %vm861, %vm862
  %v864 = vsel %vm863, %v856, %v860
  %v865 = vand.u32 2147483647, %v855
  %vm866 = vcmp.eq.f32.partialorder %v865, 8.507059e+37
  %v867 = vand.u32 %v855, 2147483648
  %v868 = vor.u32 1.1754944e-38, %v867
  %v869 = vsel %vm866, %v868, %v864
  %v870 = vmul.f32 1.0, %v869
  %v871 = vadd.f32 %v202, %v829
  %v872 = vxor.u32 %v871, 2147483648
  %v873 = vmul.f32 %v872, 1.442695
  %v874 = vpow.pop %v873
  %v875 = vadd.f32 %v874, 1.0
  %v876 = vrcp.pop %v875
  %v877 = vmul.f32 %v875, %v876
  %v878 = vsub.f32 1.0, %v877
  %v879 = vmul.f32 %v876, %v878
  %v880 = vadd.f32 %v876, %v879
  %vm881 = vweird.f32 %v875
  %vm882 = vweird.f32 %v876
  %vm883 = vmor %vm881, %vm882
  %v884 = vsel %vm883, %v876, %v880
  %v885 = vand.u32 2147483647, %v875
  %vm886 = vcmp.eq.f32.partialorder %v885, 8.507059e+37
  %v887 = vand.u32 %v875, 2147483648
  %v888 = vor.u32 1.1754944e-38, %v887
  %v889 = vsel %vm886, %v888, %v884
  %v890 = vmul.f32 1.0, %v889
  %v891 = vadd.f32 %v849, %v87
  %v892 = vmul.f32 %v870, %v891
  %v893 = vadd.f32 %v243, %v892
  %v894 = vtanh.pop %v893
  %v895 = vsub.f32 1.0, %v890
  %v896 = vmul.f32 %v895, %v894
  %v897 = vmul.f32 %v890, %v790
  %v898 = vadd.f32 %v896, %v897
  %899 = vmatpush.msra.mxu0 %v83
  %900 = vmatpush.msra.mxu0 %v80
  %901 = vmatpush.msra.mxu0 %v77
  %902 = vmatpush.msra.mxu0 %v74
  %903 = vmatpush.msra.mxu0 %v71
  %904 = vmatpush.msra.mxu0 %v68
  %905 = vmatpush.msra.mxu0 %v65
  %906 = vmatpush.msra.mxu0 %v62
  %907 = vmatpush.msra.mxu0 %v59
  %908 = vmatpush.msra.mxu0 %v56
  %909 = vmatpush.msra.mxu0 %v53
  %910 = vmatpush.msra.mxu0 %v50
  %911 = vmatpush.msra.mxu0 %v47
  %912 = vmatpush.msra.mxu0 %v44
  %913 = vmatpush.msra.mxu0 %v41
  %914 = vmatpush.msra.mxu0 %v38
  %915 = vmatmul.f32.gmra.mxu0 %v898
  %v916 = vpop.f32.mrf.mxu0
  %v917 = vadd.f32 0.0, %v916
  %918 = vdwg.mxu0
  %919 = vmatpush.msra.mxu0 %v84
  %920 = vmatpush.msra.mxu0 %v81
  %921 = vmatpush.msra.mxu0 %v78
  %922 = vmatpush.msra.mxu0 %v75
  %923 = vmatpush.msra.mxu0 %v72
  %924 = vmatpush.msra.mxu0 %v69
  %925 = vmatpush.msra.mxu0 %v66
  %926 = vmatpush.msra.mxu0 %v63
  %927 = vmatpush.msra.mxu0 %v60
  %928 = vmatpush.msra.mxu0 %v57
  %929 = vmatpush.msra.mxu0 %v54
  %930 = vmatpush.msra.mxu0 %v51
  %931 = vmatpush.msra.mxu0 %v48
  %932 = vmatpush.msra.mxu0 %v45
  %933 = vmatpush.msra.mxu0 %v42
  %934 = vmatpush.msra.mxu0 %v39
  %935 = vmatmul.f32.gmra.mxu0 %v898
  %v936 = vpop.f32.mrf.mxu0
  %v937 = vadd.f32 0.0, %v936
  %938 = vdwg.mxu0
  %939 = vmatpush.msra.mxu0 %v85
  %940 = vmatpush.msra.mxu0 %v82
  %941 = vmatpush.msra.mxu0 %v79
  %942 = vmatpush.msra.mxu0 %v76
  %943 = vmatpush.msra.mxu0 %v73
  %944 = vmatpush.msra.mxu0 %v70
  %945 = vmatpush.msra.mxu0 %v67
  %946 = vmatpush.msra.mxu0 %v64
  %947 = vmatpush.msra.mxu0 %v61
  %948 = vmatpush.msra.mxu0 %v58
  %949 = vmatpush.msra.mxu0 %v55
  %950 = vmatpush.msra.mxu0 %v52
  %951 = vmatpush.msra.mxu0 %v49
  %952 = vmatpush.msra.mxu0 %v46
  %953 = vmatpush.msra.mxu0 %v43
  %954 = vmatpush.msra.mxu0 %v40
  %955 = vmatmul.f32.gmra.mxu0 %v898
  %v956 = vpop.f32.mrf.mxu0
  %v957 = vadd.f32 0.0, %v956
  %958 = vdwg.mxu0
  %v959 = vadd.f32 %v164, %v917
  %v960 = vxor.u32 %v959, 2147483648
  %v961 = vmul.f32 %v960, 1.442695
  %v962 = vpow.pop %v961
  %v963 = vadd.f32 %v962, 1.0
  %v964 = vrcp.pop %v963
  %v965 = vmul.f32 %v963, %v964
  %v966 = vsub.f32 1.0, %v965
  %v967 = vmul.f32 %v964, %v966
  %v968 = vadd.f32 %v964, %v967
  %vm969 = vweird.f32 %v963
  %vm970 = vweird.f32 %v964
  %vm971 = vmor %vm969, %vm970
  %v972 = vsel %vm971, %v964, %v968
  %v973 = vand.u32 2147483647, %v963
  %vm974 = vcmp.eq.f32.partialorder %v973, 8.507059e+37
  %v975 = vand.u32 %v963, 2147483648
  %v976 = vor.u32 1.1754944e-38, %v975
  %v977 = vsel %vm974, %v976, %v972
  %v978 = vmul.f32 1.0, %v977
  %v979 = vadd.f32 %v205, %v937
  %v980 = vxor.u32 %v979, 2147483648
  %v981 = vmul.f32 %v980, 1.442695
  %v982 = vpow.pop %v981
  %v983 = vadd.f32 %v982, 1.0
  %v984 = vrcp.pop %v983
  %v985 = vmul.f32 %v983, %v984
  %v986 = vsub.f32 1.0, %v985
  %v987 = vmul.f32 %v984, %v986
  %v988 = vadd.f32 %v984, %v987
  %vm989 = vweird.f32 %v983
  %vm990 = vweird.f32 %v984
  %vm991 = vmor %vm989, %vm990
  %v992 = vsel %vm991, %v984, %v988
  %v993 = vand.u32 2147483647, %v983
  %vm994 = vcmp.eq.f32.partialorder %v993, 8.507059e+37
  %v995 = vand.u32 %v983, 2147483648
  %v996 = vor.u32 1.1754944e-38, %v995
  %v997 = vsel %vm994, %v996, %v992
  %v998 = vmul.f32 1.0, %v997
  %v999 = vadd.f32 %v957, %v87
  %v1000 = vmul.f32 %v978, %v999
  %v1001 = vadd.f32 %v246, %v1000
  %v1002 = vtanh.pop %v1001
  %v1003 = vsub.f32 1.0, %v998
  %v1004 = vmul.f32 %v1003, %v1002
  %v1005 = vmul.f32 %v998, %v898
  %v1006 = vadd.f32 %v1004, %v1005
  %1007 = vmatpush.msra.mxu0 %v83
  %1008 = vmatpush.msra.mxu0 %v80
  %1009 = vmatpush.msra.mxu0 %v77
  %1010 = vmatpush.msra.mxu0 %v74
  %1011 = vmatpush.msra.mxu0 %v71
  %1012 = vmatpush.msra.mxu0 %v68
  %1013 = vmatpush.msra.mxu0 %v65
  %1014 = vmatpush.msra.mxu0 %v62
  %1015 = vmatpush.msra.mxu0 %v59
  %1016 = vmatpush.msra.mxu0 %v56
  %1017 = vmatpush.msra.mxu0 %v53
  %1018 = vmatpush.msra.mxu0 %v50
  %1019 = vmatpush.msra.mxu0 %v47
  %1020 = vmatpush.msra.mxu0 %v44
  %1021 = vmatpush.msra.mxu0 %v41
  %1022 = vmatpush.msra.mxu0 %v38
  %1023 = vmatmul.f32.gmra.mxu0 %v1006
  %v1024 = vpop.f32.mrf.mxu0
  %v1025 = vadd.f32 0.0, %v1024
  %1026 = vdwg.mxu0
  %1027 = vmatpush.msra.mxu0 %v84
  %1028 = vmatpush.msra.mxu0 %v81
  %1029 = vmatpush.msra.mxu0 %v78
  %1030 = vmatpush.msra.mxu0 %v75
  %1031 = vmatpush.msra.mxu0 %v72
  %1032 = vmatpush.msra.mxu0 %v69
  %1033 = vmatpush.msra.mxu0 %v66
  %1034 = vmatpush.msra.mxu0 %v63
  %1035 = vmatpush.msra.mxu0 %v60
  %1036 = vmatpush.msra.mxu0 %v57
  %1037 = vmatpush.msra.mxu0 %v54
  %1038 = vmatpush.msra.mxu0 %v51
  %1039 = vmatpush.msra.mxu0 %v48
  %1040 = vmatpush.msra.mxu0 %v45
  %1041 = vmatpush.msra.mxu0 %v42
  %1042 = vmatpush.msra.mxu0 %v39
  %1043 = vmatmul.f32.gmra.mxu0 %v1006
  %v1044 = vpop.f32.mrf.mxu0
  %v1045 = vadd.f32 0.0, %v1044
  %1046 = vdwg.mxu0
  %1047 = vmatpush.msra.mxu0 %v85
  %1048 = vmatpush.msra.mxu0 %v82
  %1049 = vmatpush.msra.mxu0 %v79
  %1050 = vmatpush.msra.mxu0 %v76
  %1051 = vmatpush.msra.mxu0 %v73
  %1052 = vmatpush.msra.mxu0 %v70
  %1053 = vmatpush.msra.mxu0 %v67
  %1054 = vmatpush.msra.mxu0 %v64
  %1055 = vmatpush.msra.mxu0 %v61
  %1056 = vmatpush.msra.mxu0 %v58
  %1057 = vmatpush.msra.mxu0 %v55
  %1058 = vmatpush.msra.mxu0 %v52
  %1059 = vmatpush.msra.mxu0 %v49
  %1060 = vmatpush.msra.mxu0 %v46
  %1061 = vmatpush.msra.mxu0 %v43
  %1062 = vmatpush.msra.mxu0 %v40
  %1063 = vmatmul.f32.gmra.mxu0 %v1006
  %v1064 = vpop.f32.mrf.mxu0
  %v1065 = vadd.f32 0.0, %v1064
  %1066 = vdwg.mxu0
  %v1067 = vadd.f32 %v167, %v1025
  %v1068 = vxor.u32 %v1067, 2147483648
  %v1069 = vmul.f32 %v1068, 1.442695
  %v1070 = vpow.pop %v1069
  %v1071 = vadd.f32 %v1070, 1.0
  %v1072 = vrcp.pop %v1071
  %v1073 = vmul.f32 %v1071, %v1072
  %v1074 = vsub.f32 1.0, %v1073
  %v1075 = vmul.f32 %v1072, %v1074
  %v1076 = vadd.f32 %v1072, %v1075
  %vm1077 = vweird.f32 %v1071
  %vm1078 = vweird.f32 %v1072
  %vm1079 = vmor %vm1077, %vm1078
  %v1080 = vsel %vm1079, %v1072, %v1076
  %v1081 = vand.u32 2147483647, %v1071
  %vm1082 = vcmp.eq.f32.partialorder %v1081, 8.507059e+37
  %v1083 = vand.u32 %v1071, 2147483648
  %v1084 = vor.u32 1.1754944e-38, %v1083
  %v1085 = vsel %vm1082, %v1084, %v1080
  %v1086 = vmul.f32 1.0, %v1085
  %v1087 = vadd.f32 %v208, %v1045
  %v1088 = vxor.u32 %v1087, 2147483648
  %v1089 = vmul.f32 %v1088, 1.442695
  %v1090 = vpow.pop %v1089
  %v1091 = vadd.f32 %v1090, 1.0
  %v1092 = vrcp.pop %v1091
  %v1093 = vmul.f32 %v1091, %v1092
  %v1094 = vsub.f32 1.0, %v1093
  %v1095 = vmul.f32 %v1092, %v1094
  %v1096 = vadd.f32 %v1092, %v1095
  %vm1097 = vweird.f32 %v1091
  %vm1098 = vweird.f32 %v1092
  %vm1099 = vmor %vm1097, %vm1098
  %v1100 = vsel %vm1099, %v1092, %v1096
  %v1101 = vand.u32 2147483647, %v1091
  %vm1102 = vcmp.eq.f32.partialorder %v1101, 8.507059e+37
  %v1103 = vand.u32 %v1091, 2147483648
  %v1104 = vor.u32 1.1754944e-38, %v1103
  %v1105 = vsel %vm1102, %v1104, %v1100
  %v1106 = vmul.f32 1.0, %v1105
  %v1107 = vadd.f32 %v1065, %v87
  %v1108 = vmul.f32 %v1086, %v1107
  %v1109 = vadd.f32 %v249, %v1108
  %v1110 = vtanh.pop %v1109
  %v1111 = vsub.f32 1.0, %v1106
  %v1112 = vmul.f32 %v1111, %v1110
  %v1113 = vmul.f32 %v1106, %v1006
  %v1114 = vadd.f32 %v1112, %v1113
  %v1115 = vld [vmem:[%s5] sm:$0xff]
  %v1116 = vld [vmem:[%s5 + $0x8] sm:$0xff]
  %v1117 = vld [vmem:[%s5 + $0x10] sm:$0xff]
  %v1118 = vld [vmem:[%s5 + $0x18] sm:$0xff]
  %v1119 = vld [vmem:[%s5 + $0x20] sm:$0xff]
  %v1120 = vld [vmem:[%s5 + $0x28] sm:$0xff]
  %v1121 = vld [vmem:[%s5 + $0x30] sm:$0xff]
  %v1122 = vld [vmem:[%s5 + $0x38] sm:$0xff]
  %v1123 = vld [vmem:[%s5 + $0x40] sm:$0xff]
  %v1124 = vld [vmem:[%s5 + $0x48] sm:$0xff]
  %v1125 = vld [vmem:[%s5 + $0x50] sm:$0xff]
  %v1126 = vld [vmem:[%s5 + $0x58] sm:$0xff]
  %v1127 = vld [vmem:[%s5 + $0x60] sm:$0xff]
  %v1128 = vld [vmem:[%s5 + $0x68] sm:$0xff]
  %v1129 = vld [vmem:[%s5 + $0x70] sm:$0xff]
  %v1130 = vld [vmem:[%s5 + $0x78] sm:$0xff]
  %v1131 = vld [vmem:[%s6] sm:$0x1]
  %v1133 = vperm.slane %v1131, 0
  %1135 = vmatpush.msra.mxu0 %v1130
  %1136 = vmatpush.msra.mxu0 %v1129
  %1137 = vmatpush.msra.mxu0 %v1128
  %1138 = vmatpush.msra.mxu0 %v1127
  %1139 = vmatpush.msra.mxu0 %v1126
  %1140 = vmatpush.msra.mxu0 %v1125
  %1141 = vmatpush.msra.mxu0 %v1124
  %1142 = vmatpush.msra.mxu0 %v1123
  %1143 = vmatpush.msra.mxu0 %v1122
  %1144 = vmatpush.msra.mxu0 %v1121
  %1145 = vmatpush.msra.mxu0 %v1120
  %1146 = vmatpush.msra.mxu0 %v1119
  %1147 = vmatpush.msra.mxu0 %v1118
  %1148 = vmatpush.msra.mxu0 %v1117
  %1149 = vmatpush.msra.mxu0 %v1116
  %1150 = vmatpush.msra.mxu0 %v1115
  %1151 = vmatmul.f32.gmra.mxu0 %v1114
  %v1152 = vpop.f32.mrf.mxu0
  %v1153 = vadd.f32 %v1133, %v1152
  %1154 = vdwg.mxu0
  %v1155 = vmax.f32 %v1153, 0.0
  %v1156 = vld [vmem:[%s7] sm:$0x1]
  %v1158 = vperm.slane %v1156, 0
  %v1160 = vmul.f32 %v1155, %v1158
  %1161 = vadd.xlane.f32.xlu0 %v1160
  %v1162 = vpop.xlane.xlu0 %1161
  %v1163 = vld [vmem:[%s8] sm:$0x1]
  %v1165 = vperm.slane %v1163, 0
  %v1166 = vlaneseq
  %v1167 = vshrl.u32 %v1166, 7
  %1169 = vset.pattern.permute.xlu0 %v1167
  %1170 = vperm.xlu0 %1169, %v1165
  %v1171 = vpop.permute.xlu0 %1170
  %v1173 = vadd.f32 %v1162, %v1171
  %1175 = vset.pattern.permute.xlu0 0
  %1176 = vperm.xlu0 %1175, %v1173
  %v1177 = vpop.permute.xlu0 %1176
  %v1178 = vlaneseq
  %v1179 = vand.u32 %v1178, 127
  %v1180 = vperm.slane %v1177, %v1179
  %vm1181 = vcmask 1042434
  %v1182 = vsel %vm1181, %v1180, %v1180
  %vm1183 = vcmask 1043459
  %v1184 = vsel %vm1183, %v1180, %v1182
  %vm1185 = vcmask 1044484
  %v1186 = vsel %vm1185, %v1180, %v1184
  %vm1187 = vcmask 1045509
  %v1188 = vsel %vm1187, %v1180, %v1186
  %vm1189 = vcmask 1046534
  %v1190 = vsel %vm1189, %v1180, %v1188
  %vm1191 = vcmask 1047559
  %v1192 = vsel %vm1191, %v1180, %v1190
  %vm1194 = vcmask 64512
  %1195 = vst.msk [vmem:[%s9] sm:$0xff] %vm1194, %v1192
  // Predicated region
  $region38: #{independent_gru_forward.1} parent=0 // pred_check
    _
  $region39: #{independent_gru_forward.1} parent=0 // pred_check_branch
    %1197 = sbr.rel (0) target = $region41
  $region40: #{independent_gru_forward.1} parent=0 // pred_region
    _
  $region41: #{independent_gru_forward.1} parent=0 // pred_fallthru
    _
  // Predicated region
  $region42: #{independent_gru_forward.1} parent=0 // pred_check
    _
  $region43: #{independent_gru_forward.1} parent=0 // pred_check_branch
    %1199 = sbr.rel (0) target = $region45
  $region44: #{independent_gru_forward.1} parent=0 // pred_region
    _
  $region45: #{independent_gru_forward.1} parent=0 // pred_fallthru
    _

</llo_original>
